<compile_context>
chip_gen: v7x
topology: tpu7x:2x2x1
jax: 0.10.0
libtpu: 0.0.40
codegen_flags: <defaults>
</compile_context>

<pallas_src>
import jax
import jax.numpy as jnp
from jax.experimental import pallas as pl
from jax.experimental.pallas import tpu as pltpu

_LANES = 128                      # vreg lane width; last dim of the slab
_MAX_TILE_ROWS = 2048             # (2048, 128) f32 tile = 1 MiB per buffer
_MIN_ELEMS_FOR_PALLAS = 1 << 17   # below this, fused XLA elementwise wins


def _round_up(x, m):
    return ((x + m - 1) // m) * m


def _loss_kernel(w_ref, x_ref, o_ref):
    # w_ref: SMEM (1, 1) scalar weight of Linear(1, 1, bias=False)
    # x_ref: VMEM (tile_rows, 128) lane-dense input tile
    # o_ref: VMEM (tile_rows, 128) output tile = |x*w - x|  (exact PyTorch graph)
    w = w_ref[0, 0]
    x = x_ref[...]
    o_ref[...] = jnp.abs(x * w - x)


def _row_axis_semantics():
    """CORE_PARALLEL on multi-TensorCore chips (v7x); plain 'parallel' elsewhere."""
    try:
        info = pltpu.get_tpu_info()
        ver = str(getattr(info, "chip_version", "") or "")
        cores = int(getattr(info, "num_cores", 1) or 1)
        if cores > 1 or "7" in ver:
            return (pltpu.CORE_PARALLEL,)
    except Exception:
        pass
    return ("parallel",)


def model_forward(x, weight):
    """loss = |Linear(x) - x| for Linear(1, 1, bias=False); x has shape (N, 1)."""
    x32 = x.astype(jnp.float32)                      # mirrors `.float()` in forward
    w32 = weight.astype(jnp.float32).reshape(1, 1)
    orig_shape = x32.shape
    total = x32.size

    # Small or lane-unaligned payloads: fused XLA elementwise is already at the
    # HBM roofline and avoids any pad/slice copies around a kernel launch.
    if total < _MIN_ELEMS_FOR_PALLAS or total % _LANES != 0:
        return jnp.abs(x32 * w32[0, 0] - x32)

    # ---- Lane-dense layout, zero-copy: (N, 1) -> (rows, 128) is a bitcast ----
    rows = total // _LANES
    slab = x32.reshape(rows, _LANES)
    tile_rows = min(_MAX_TILE_ROWS, _round_up(rows, 8))
    grid = (pl.cdiv(rows, tile_rows),)               # last block may be partial

    def run(semantics):
        return pl.pallas_call(
            _loss_kernel,
            out_shape=jax.ShapeDtypeStruct((rows, _LANES), jnp.float32),
            grid=grid,
            in_specs=[
                pl.BlockSpec(memory_space=pltpu.SMEM),                # (1,1) weight
                pl.BlockSpec((tile_rows, _LANES), lambda i: (i, 0)),  # input tile
            ],
            out_specs=pl.BlockSpec((tile_rows, _LANES), lambda i: (i, 0)),
            compiler_params=pltpu.CompilerParams(
                dimension_semantics=semantics,
                vmem_limit_bytes=32 << 20,            # headroom, safe on v5e/v6e/v7x
            ),
            cost_estimate=pl.CostEstimate(
                flops=3 * total,                      # mul + sub + abs per element
                transcendentals=0,
                bytes_accessed=8 * total,             # 1 f32 read + 1 f32 write
            ),
        )(w32, slab)

    semantics = _row_axis_semantics()
    try:
        out_slab = run(semantics)
    except Exception:
        if semantics == ("parallel",):
            raise
        out_slab = run(("parallel",))                 # fallback if CORE_PARALLEL rejected

    return out_slab.reshape(orig_shape)               # bitcast back to (N, 1)


if __name__ == "__main__":
    key = jax.random.PRNGKey(0)
    k_x, k_w, k_xs = jax.random.split(key, 3)

    # Deterministic weight init (PyTorch draws U(-1, 1) for fan_in=1).
    w = jax.random.uniform(k_w, (1, 1), dtype=jnp.float32, minval=-1.0, maxval=1.0)

    # Pallas path: lane-aligned payload (2^19 scalar features = 2 MiB f32),
    # rows = 4096 -> grid of 2 row tiles of (2048, 128).
    N = 1 << 19
    x = jax.random.normal(k_x, (N, 1), dtype=jnp.float32)
    loss = model_forward(x, w)
    jax.block_until_ready(loss)

    ref = jnp.abs(jnp.dot(x, w.T, precision=jax.lax.Precision.HIGHEST) - x)
    assert loss.shape == ref.shape, "shape mismatch vs reference"
    assert jnp.allclose(loss, ref, atol=1e-6), "mismatch vs reference (pallas path)"

    # Tiny batch (like the original N=8 test) goes through the plain-JAX path.
    xs = jax.random.normal(k_xs, (8, 1), dtype=jnp.float32)
    loss_s = model_forward(xs, w)
    jax.block_until_ready(loss_s)
    ref_s = jnp.abs(jnp.dot(xs, w.T, precision=jax.lax.Precision.HIGHEST) - xs)
    assert jnp.allclose(loss_s, ref_s, atol=1e-6), "mismatch vs reference (small path)"

    print("KERNEL_OK")
</pallas_src>

<mosaic_0001>
module attributes {stable_mosaic.version = 11 : i64} {
  func.func @_loss_kernel(%arg0: i32, %arg1: memref<1x1xf32, #tpu.memory_space<smem>>, %arg2: memref<2048x128xf32, #tpu.memory_space<vmem>>, %arg3: memref<2048x128xf32, #tpu.memory_space<vmem>>) attributes {dimension_semantics = [#tpu.dimension_semantics<parallel>], iteration_bounds = array<i64: 2>, scalar_prefetch = 0 : i64, scratch_operands = 0 : i64, tpu.core_type = #tpu.core_type<tc>, window_params = [{transform_indices = @transform_0, window_bounds = array<i64: 1, 1>}, {transform_indices = @transform_1, window_bounds = array<i64: 2048, 128>}, {transform_indices = @transform_2, window_bounds = array<i64: 2048, 128>}]} {
    %c0 = arith.constant 0 : index
    %c0_0 = arith.constant 0 : index
    %0 = memref.load %arg1[%c0, %c0_0] : memref<1x1xf32, #tpu.memory_space<smem>>
    %c0_1 = arith.constant 0 : index
    %c0_2 = arith.constant 0 : index
    %1 = vector.load %arg2[%c0_1, %c0_2] : memref<2048x128xf32, #tpu.memory_space<vmem>>, vector<2048x128xf32>
    %2 = vector.broadcast %0 : f32 to vector<2048x128xf32>
    %3 = arith.mulf %1, %2 : vector<2048x128xf32>
    %4 = arith.subf %3, %1 : vector<2048x128xf32>
    %5 = math.absf %4 : vector<2048x128xf32>
    %c0_3 = arith.constant 0 : index
    %c0_4 = arith.constant 0 : index
    %6 = vector.load %arg3[%c0_3, %c0_4] : memref<2048x128xf32, #tpu.memory_space<vmem>>, vector<2048x128xf32>
    tpu.vector_store %arg3[%c0_3, %c0_4], %5 {strides = array<i32>} : memref<2048x128xf32, #tpu.memory_space<vmem>>, vector<2048x128xf32>,
    return
  }
  func.func @transform_0(%arg0: i32) -> (i32, i32) {
    %c0_i32 = arith.constant 0 : i32
    %c0_i32_0 = arith.constant 0 : i32
    %c0_i32_1 = arith.constant 0 : i32
    return %c0_i32, %c0_i32_0 : i32, i32
  }
  func.func @transform_1(%arg0: i32) -> (i32, i32) {
    %c0_i32 = arith.constant 0 : i32
    %c0_i32_0 = arith.constant 0 : i32
    return %arg0, %c0_i32 : i32, i32
  }
  func.func @transform_2(%arg0: i32) -> (i32, i32) {
    %c0_i32 = arith.constant 0 : i32
    %c0_i32_0 = arith.constant 0 : i32
    return %arg0, %c0_i32 : i32, i32
  }
}

</mosaic_0001>

<llo_original>
// kernel: tpu_custom_call.1
$region0: #{tpu_custom_call.1}
  #allocation0 [shape = 'u32[]', space=smem, size = 0x4, offset = 0x4, fixed_abs, tag = 'smem constant byte address 0x4 - core index']
  #allocation1 [shape = 'u32[144,128]{1,0:T(1,128)}', space=vmem, size = 0x12000, scoped, tag = 'internal scratch']
  #allocation2 [shape = 'f32[1,1]{1,0:T(1,128)S(6)}', space=smem, size = 0x200, scoped, tag = 'scoped memory for tpu_custom_call.1']
  %s0 = inlined_call_operand.<no memory space> [shape: f32[1,1], index: 0, kind: input, shape index: {}]
  %s1 = inlined_call_operand.hbm [shape: f32[4096,128], index: 1, kind: input, shape index: {}]
  %s2 = inlined_call_operand.hbm [shape: f32[4096,128], index: 2, kind: output, shape index: {}]
  %s3 = sld [smem:[#allocation0]]
  $region45: #{tpu_custom_call.1} parent=0
    _
  %s5 = ssub.s32 1, %s3
  %s6 = scalar_select 0, %s5, %s3
  %7 = sst [smem:[#allocation2]] %s0
  $region1: #{tpu_custom_call.1} parent=0
    #allocation3 [shape = 'u8[2097152]{0}', space=vmem, size = 0x200000, scoped, tag = 'input window, operand 1']
    #allocation4 [shape = 's32[2]{0}', space=sflag, size = 0x8, scoped, tag = 'scoped memory for tpu_custom_call.1']
    #allocation5 [shape = 's32[2]{0}', space=sflag, size = 0x8, scoped, tag = 'scoped memory for tpu_custom_call.1']
    #allocation6 [shape = 'u8[2097152]{0}', space=vmem, size = 0x200000, scoped, tag = 'output window, operand 0']
    %8 = vsyncpa [#allocation4], 0
    %s9 = scalar_lea.sflag [#allocation4], 1
    %10 = vsyncpa %s9, 0
    %11 = vsyncpa [#allocation5], 0
    %s12 = scalar_lea.sflag [#allocation5], 1
    %13 = vsyncpa %s12, 0
    loop: start=0, step=1, limit=4
    $region2: #{tpu_custom_call.1} parent=1 // loop_pre_header
      _
    $region3: #{tpu_custom_call.1} parent=1 // loop_header
      %s15 = sphi 0, %s19
      %p16 = scmp.ge.s32.totalorder %s15, 4
      %s23 = sphi 0, %s23
      %s25 = sphi 0, %s23
      %s26 = sphi 0, %s25
      %s40 = sphi 0, %s26
      %s46 = sphi 0, %s48
      %s49 = sphi 0, %s46
      %s50 = sphi 0, %s49
      %s66 = sphi 0, %s50
      %s72 = sphi 0, %s74
      %s75 = sphi 0, %s72
      %s76 = sphi 0, %s75
      %s92 = sphi 0, %s76
    $region4: #{tpu_custom_call.1} parent=1 // loop_header_branch
      %18 = sbr.rel (%p16) target = $region8
    $region5: #{tpu_custom_call.1} parent=1 // loop_body
      %s20 = ssub.s32 %s15, 1
      %s21 = ssub.s32 %s15, 2
      %s22 = sadd.s32 %s15, 1
      %s24 = sadd.s32 %s23, 1
      %p27 = scmp.eq.s32.totalorder %s15, 1
      %p28 = scmp.ne.s32.totalorder %s23, %s25
      %p29 = scmp.eq.s32.totalorder %s15, 0
      %p30 = por %p28, %p29
      %p31 = scmp.ne.s32.totalorder %s23, %s25
      %p32 = scmp.eq.s32.totalorder %s20, 1
      %p33 = por %p31, %p32
      %p34 = scmp.ne.s32.totalorder %s25, %s26
      %p35 = scmp.eq.s32.totalorder %s20, 0
      %p36 = por %p34, %p35
      %p37 = scmp.ne.s32.totalorder %s25, %s26
      %p38 = scmp.eq.s32.totalorder %s21, 1
      %p39 = por %p37, %p38
      %p41 = scmp.ne.s32.totalorder %s26, %s40
      %p42 = scmp.eq.s32.totalorder %s21, 0
      %p43 = por %p41, %p42
      %s44 = ssub.s32 %s15, %s22
      %p45 = scmp.eq.s32.totalorder %s44, 0
      %s47 = sadd.s32 %s46, 1
      %s48 = scalar_select %p45, %s46, %s47
      %p51 = pneg %p45
      %p52 = scmp.eq.s32.totalorder %s15, 1
      %p53 = por %p51, %p52
      %p54 = scmp.ne.s32.totalorder %s46, %s49
      %p55 = scmp.eq.s32.totalorder %s15, 0
      %p56 = por %p54, %p55
      %p57 = scmp.ne.s32.totalorder %s46, %s49
      %p58 = scmp.eq.s32.totalorder %s20, 1
      %p59 = por %p57, %p58
      %p60 = scmp.ne.s32.totalorder %s49, %s50
      %p61 = scmp.eq.s32.totalorder %s20, 0
      %p62 = por %p60, %p61
      %p63 = scmp.ne.s32.totalorder %s49, %s50
      %p64 = scmp.eq.s32.totalorder %s21, 1
      %p65 = por %p63, %p64
      %p67 = scmp.ne.s32.totalorder %s50, %s66
      %p68 = scmp.eq.s32.totalorder %s21, 0
      %p69 = por %p67, %p68
      %s70 = ssub.s32 %s15, %s22
      %p71 = scmp.eq.s32.totalorder %s70, 0
      %s73 = sadd.s32 %s72, 1
      %s74 = scalar_select %p71, %s72, %s73
      %p77 = pneg %p71
      %p78 = scmp.eq.s32.totalorder %s15, 1
      %p79 = por %p77, %p78
      %p80 = scmp.ne.s32.totalorder %s72, %s75
      %p81 = scmp.eq.s32.totalorder %s15, 0
      %p82 = por %p80, %p81
      %p83 = scmp.ne.s32.totalorder %s72, %s75
      %p84 = scmp.eq.s32.totalorder %s20, 1
      %p85 = por %p83, %p84
      %p86 = scmp.ne.s32.totalorder %s75, %s76
      %p87 = scmp.eq.s32.totalorder %s20, 0
      %p88 = por %p86, %p87
      %p89 = scmp.ne.s32.totalorder %s75, %s76
      %p90 = scmp.eq.s32.totalorder %s21, 1
      %p91 = por %p89, %p90
      %p93 = scmp.ne.s32.totalorder %s76, %s92
      %p94 = scmp.eq.s32.totalorder %s21, 0
      %p95 = por %p93, %p94
      %p96 = scmp.le.s32.totalorder 1, %s15
      %p97 = scmp.lt.s32.totalorder %s15, 3
      %p98 = pnand %p96, %p97
      %p99 = pneg %p98
      // Predicated region
      $region9: #{tpu_custom_call.1} parent=5 // pred_check
        _
      $region10: #{tpu_custom_call.1} parent=5 // pred_check_branch
        %101 = sbr.rel (%p98) target = $region12
      $region11: #{tpu_custom_call.1} parent=5 // pred_region
        %s102 = ssub.s32 %s15, 1
        // Predicated region
        $region13: #{tpu_custom_call.1} parent=11 // pred_check
          %p103 = pneg %p36
        $region14: #{tpu_custom_call.1} parent=11 // pred_check_branch
          %105 = sbr.rel (%p103) target = $region16
        $region15: #{tpu_custom_call.1} parent=11 // pred_region
          _
        $region16: #{tpu_custom_call.1} parent=11 // pred_fallthru
          _
      $region12: #{tpu_custom_call.1} parent=5 // pred_fallthru
        _
      %p106 = scmp.lt.s32.totalorder %s15, 2
      // Predicated region
      $region17: #{tpu_custom_call.1} parent=5 // pred_check
        %p107 = pneg %p106
      $region18: #{tpu_custom_call.1} parent=5 // pred_check_branch
        %109 = sbr.rel (%p107) target = $region20
      $region19: #{tpu_custom_call.1} parent=5 // pred_region
        // Predicated region
        $region21: #{tpu_custom_call.1} parent=19 // pred_check
          %p110 = pneg %p56
        $region22: #{tpu_custom_call.1} parent=19 // pred_check_branch
          %112 = sbr.rel (%p110) target = $region24
        $region23: #{tpu_custom_call.1} parent=19 // pred_region
          %s113 = sand.u32 %s46, 1
          %s114 = scalar_lea.sflag [#allocation4], %s113
          %s115 = sand.u32 %s46, 1
          %s116 = smul.addr %s115, 2048
          %s117 = scalar_lea.vmem [#allocation3], %s116
          %s118 = smul.u32 256, %s15
          %s120 = ssub.s32 32768, 32768
          %121 = vsyncadd %s114, %s120
          %s122 = smul.addr %s118, 128
          %s123 = scalar_lea.hbm %s1, %s122
          %s124 = sshll.u32 %s117, 4
          %s125 = int_to_ptr.vmem [resolvable:$true] %s124
          %130 = dma.hbm_to_vmem [thread:$0]  %s123, 32768, %s125, %s114, 128, 128, 8
        $region24: #{tpu_custom_call.1} parent=19 // pred_fallthru
          _
      $region20: #{tpu_custom_call.1} parent=5 // pred_fallthru
        _
      %p131 = scmp.le.s32.totalorder 1, %s15
      %p132 = scmp.lt.s32.totalorder %s15, 3
      %p133 = pnand %p131, %p132
      %p134 = pneg %p133
      // Predicated region
      $region25: #{tpu_custom_call.1} parent=5 // pred_check
        _
      $region26: #{tpu_custom_call.1} parent=5 // pred_check_branch
        %136 = sbr.rel (%p133) target = $region28
      $region27: #{tpu_custom_call.1} parent=5 // pred_region
        %s137 = ssub.s32 %s15, 1
        %s138 = sand.u32 %s49, 1
        %s139 = scalar_lea.sflag [#allocation4], %s138
        %s140 = sand.u32 %s49, 1
        %s141 = smul.addr %s140, 2048
        %s142 = scalar_lea.vmem [#allocation3], %s141
        // Predicated region
        $region29: #{tpu_custom_call.1} parent=27 // pred_check
          %p143 = pneg %p62
        $region30: #{tpu_custom_call.1} parent=27 // pred_check_branch
          %145 = sbr.rel (%p143) target = $region32
        $region31: #{tpu_custom_call.1} parent=27 // pred_region
          %146 = dma.done %s139, 32768
        $region32: #{tpu_custom_call.1} parent=27 // pred_fallthru
          _
        %p147 = pneg %p36
        %p148 = pneg %p33
        %s149 = sand.u32 %s49, 1
        %s150 = scalar_lea.sflag [#allocation4], %s149
        %s151 = sand.u32 %s49, 1
        %s152 = smul.addr %s151, 2048
        %s153 = scalar_lea.vmem [#allocation3], %s152
        %p154 = pneg %p62
        %p155 = pneg %p59
        %p156 = pneg %p88
        %p157 = pneg %p85
        %s158 = sand.u32 %s75, 1
        %s159 = scalar_lea.sflag [#allocation5], %s158
        %s160 = sand.u32 %s75, 1
        %s161 = smul.addr %s160, 2048
        %s162 = scalar_lea.vmem [#allocation6], %s161
        %s163 = smul.u32 256, %s20
        %s164 = smul.u32 256, %s20
        %s165 = sld [smem:[#allocation2]]
        %v166 = vld [vmem:[%s142] sm:$0xff]
        %v167 = vld [vmem:[%s142 + $0x8] sm:$0xff]
        %v168 = vld [vmem:[%s142 + $0x10] sm:$0xff]
        %v169 = vld [vmem:[%s142 + $0x18] sm:$0xff]
        %v170 = vld [vmem:[%s142 + $0x20] sm:$0xff]
        %v171 = vld [vmem:[%s142 + $0x28] sm:$0xff]
        %v172 = vld [vmem:[%s142 + $0x30] sm:$0xff]
        %v173 = vld [vmem:[%s142 + $0x38] sm:$0xff]
        %v174 = vld [vmem:[%s142 + $0x40] sm:$0xff]
        %v175 = vld [vmem:[%s142 + $0x48] sm:$0xff]
        %v176 = vld [vmem:[%s142 + $0x50] sm:$0xff]
        %v177 = vld [vmem:[%s142 + $0x58] sm:$0xff]
        %v178 = vld [vmem:[%s142 + $0x60] sm:$0xff]
        %v179 = vld [vmem:[%s142 + $0x68] sm:$0xff]
        %v180 = vld [vmem:[%s142 + $0x70] sm:$0xff]
        %v181 = vld [vmem:[%s142 + $0x78] sm:$0xff]
        %v182 = vld [vmem:[%s142 + $0x80] sm:$0xff]
        %v183 = vld [vmem:[%s142 + $0x88] sm:$0xff]
        %v184 = vld [vmem:[%s142 + $0x90] sm:$0xff]
        %v185 = vld [vmem:[%s142 + $0x98] sm:$0xff]
        %v186 = vld [vmem:[%s142 + $0xa0] sm:$0xff]
        %v187 = vld [vmem:[%s142 + $0xa8] sm:$0xff]
        %v188 = vld [vmem:[%s142 + $0xb0] sm:$0xff]
        %v189 = vld [vmem:[%s142 + $0xb8] sm:$0xff]
        %v190 = vld [vmem:[%s142 + $0xc0] sm:$0xff]
        %v191 = vld [vmem:[%s142 + $0xc8] sm:$0xff]
        %v192 = vld [vmem:[%s142 + $0xd0] sm:$0xff]
        %v193 = vld [vmem:[%s142 + $0xd8] sm:$0xff]
        %v194 = vld [vmem:[%s142 + $0xe0] sm:$0xff]
        %v195 = vld [vmem:[%s142 + $0xe8] sm:$0xff]
        %v196 = vld [vmem:[%s142 + $0xf0] sm:$0xff]
        %v197 = vld [vmem:[%s142 + $0xf8] sm:$0xff]
        %v198 = vld [vmem:[%s142 + $0x100] sm:$0xff]
        %v199 = vld [vmem:[%s142 + $0x108] sm:$0xff]
        %v200 = vld [vmem:[%s142 + $0x110] sm:$0xff]
        %v201 = vld [vmem:[%s142 + $0x118] sm:$0xff]
        %v202 = vld [vmem:[%s142 + $0x120] sm:$0xff]
        %v203 = vld [vmem:[%s142 + $0x128] sm:$0xff]
        %v204 = vld [vmem:[%s142 + $0x130] sm:$0xff]
        %v205 = vld [vmem:[%s142 + $0x138] sm:$0xff]
        %v206 = vld [vmem:[%s142 + $0x140] sm:$0xff]
        %v207 = vld [vmem:[%s142 + $0x148] sm:$0xff]
        %v208 = vld [vmem:[%s142 + $0x150] sm:$0xff]
        %v209 = vld [vmem:[%s142 + $0x158] sm:$0xff]
        %v210 = vld [vmem:[%s142 + $0x160] sm:$0xff]
        %v211 = vld [vmem:[%s142 + $0x168] sm:$0xff]
        %v212 = vld [vmem:[%s142 + $0x170] sm:$0xff]
        %v213 = vld [vmem:[%s142 + $0x178] sm:$0xff]
        %v214 = vld [vmem:[%s142 + $0x180] sm:$0xff]
        %v215 = vld [vmem:[%s142 + $0x188] sm:$0xff]
        %v216 = vld [vmem:[%s142 + $0x190] sm:$0xff]
        %v217 = vld [vmem:[%s142 + $0x198] sm:$0xff]
        %v218 = vld [vmem:[%s142 + $0x1a0] sm:$0xff]
        %v219 = vld [vmem:[%s142 + $0x1a8] sm:$0xff]
        %v220 = vld [vmem:[%s142 + $0x1b0] sm:$0xff]
        %v221 = vld [vmem:[%s142 + $0x1b8] sm:$0xff]
        %v222 = vld [vmem:[%s142 + $0x1c0] sm:$0xff]
        %v223 = vld [vmem:[%s142 + $0x1c8] sm:$0xff]
        %v224 = vld [vmem:[%s142 + $0x1d0] sm:$0xff]
        %v225 = vld [vmem:[%s142 + $0x1d8] sm:$0xff]
        %v226 = vld [vmem:[%s142 + $0x1e0] sm:$0xff]
        %v227 = vld [vmem:[%s142 + $0x1e8] sm:$0xff]
        %v228 = vld [vmem:[%s142 + $0x1f0] sm:$0xff]
        %v229 = vld [vmem:[%s142 + $0x1f8] sm:$0xff]
        %v230 = vld [vmem:[%s142 + $0x200] sm:$0xff]
        %v231 = vld [vmem:[%s142 + $0x208] sm:$0xff]
        %v232 = vld [vmem:[%s142 + $0x210] sm:$0xff]
        %v233 = vld [vmem:[%s142 + $0x218] sm:$0xff]
        %v234 = vld [vmem:[%s142 + $0x220] sm:$0xff]
        %v235 = vld [vmem:[%s142 + $0x228] sm:$0xff]
        %v236 = vld [vmem:[%s142 + $0x230] sm:$0xff]
        %v237 = vld [vmem:[%s142 + $0x238] sm:$0xff]
        %v238 = vld [vmem:[%s142 + $0x240] sm:$0xff]
        %v239 = vld [vmem:[%s142 + $0x248] sm:$0xff]
        %v240 = vld [vmem:[%s142 + $0x250] sm:$0xff]
        %v241 = vld [vmem:[%s142 + $0x258] sm:$0xff]
        %v242 = vld [vmem:[%s142 + $0x260] sm:$0xff]
        %v243 = vld [vmem:[%s142 + $0x268] sm:$0xff]
        %v244 = vld [vmem:[%s142 + $0x270] sm:$0xff]
        %v245 = vld [vmem:[%s142 + $0x278] sm:$0xff]
        %v246 = vld [vmem:[%s142 + $0x280] sm:$0xff]
        %v247 = vld [vmem:[%s142 + $0x288] sm:$0xff]
        %v248 = vld [vmem:[%s142 + $0x290] sm:$0xff]
        %v249 = vld [vmem:[%s142 + $0x298] sm:$0xff]
        %v250 = vld [vmem:[%s142 + $0x2a0] sm:$0xff]
        %v251 = vld [vmem:[%s142 + $0x2a8] sm:$0xff]
        %v252 = vld [vmem:[%s142 + $0x2b0] sm:$0xff]
        %v253 = vld [vmem:[%s142 + $0x2b8] sm:$0xff]
        %v254 = vld [vmem:[%s142 + $0x2c0] sm:$0xff]
        %v255 = vld [vmem:[%s142 + $0x2c8] sm:$0xff]
        %v256 = vld [vmem:[%s142 + $0x2d0] sm:$0xff]
        %v257 = vld [vmem:[%s142 + $0x2d8] sm:$0xff]
        %v258 = vld [vmem:[%s142 + $0x2e0] sm:$0xff]
        %v259 = vld [vmem:[%s142 + $0x2e8] sm:$0xff]
        %v260 = vld [vmem:[%s142 + $0x2f0] sm:$0xff]
        %v261 = vld [vmem:[%s142 + $0x2f8] sm:$0xff]
        %v262 = vld [vmem:[%s142 + $0x300] sm:$0xff]
        %v263 = vld [vmem:[%s142 + $0x308] sm:$0xff]
        %v264 = vld [vmem:[%s142 + $0x310] sm:$0xff]
        %v265 = vld [vmem:[%s142 + $0x318] sm:$0xff]
        %v266 = vld [vmem:[%s142 + $0x320] sm:$0xff]
        %v267 = vld [vmem:[%s142 + $0x328] sm:$0xff]
        %v268 = vld [vmem:[%s142 + $0x330] sm:$0xff]
        %v269 = vld [vmem:[%s142 + $0x338] sm:$0xff]
        %v270 = vld [vmem:[%s142 + $0x340] sm:$0xff]
        %v271 = vld [vmem:[%s142 + $0x348] sm:$0xff]
        %v272 = vld [vmem:[%s142 + $0x350] sm:$0xff]
        %v273 = vld [vmem:[%s142 + $0x358] sm:$0xff]
        %v274 = vld [vmem:[%s142 + $0x360] sm:$0xff]
        %v275 = vld [vmem:[%s142 + $0x368] sm:$0xff]
        %v276 = vld [vmem:[%s142 + $0x370] sm:$0xff]
        %v277 = vld [vmem:[%s142 + $0x378] sm:$0xff]
        %v278 = vld [vmem:[%s142 + $0x380] sm:$0xff]
        %v279 = vld [vmem:[%s142 + $0x388] sm:$0xff]
        %v280 = vld [vmem:[%s142 + $0x390] sm:$0xff]
        %v281 = vld [vmem:[%s142 + $0x398] sm:$0xff]
        %v282 = vld [vmem:[%s142 + $0x3a0] sm:$0xff]
        %v283 = vld [vmem:[%s142 + $0x3a8] sm:$0xff]
        %v284 = vld [vmem:[%s142 + $0x3b0] sm:$0xff]
        %v285 = vld [vmem:[%s142 + $0x3b8] sm:$0xff]
        %v286 = vld [vmem:[%s142 + $0x3c0] sm:$0xff]
        %v287 = vld [vmem:[%s142 + $0x3c8] sm:$0xff]
        %v288 = vld [vmem:[%s142 + $0x3d0] sm:$0xff]
        %v289 = vld [vmem:[%s142 + $0x3d8] sm:$0xff]
        %v290 = vld [vmem:[%s142 + $0x3e0] sm:$0xff]
        %v291 = vld [vmem:[%s142 + $0x3e8] sm:$0xff]
        %v292 = vld [vmem:[%s142 + $0x3f0] sm:$0xff]
        %v293 = vld [vmem:[%s142 + $0x3f8] sm:$0xff]
        %v294 = vld [vmem:[%s142 + $0x400] sm:$0xff]
        %v295 = vld [vmem:[%s142 + $0x408] sm:$0xff]
        %v296 = vld [vmem:[%s142 + $0x410] sm:$0xff]
        %v297 = vld [vmem:[%s142 + $0x418] sm:$0xff]
        %v298 = vld [vmem:[%s142 + $0x420] sm:$0xff]
        %v299 = vld [vmem:[%s142 + $0x428] sm:$0xff]
        %v300 = vld [vmem:[%s142 + $0x430] sm:$0xff]
        %v301 = vld [vmem:[%s142 + $0x438] sm:$0xff]
        %v302 = vld [vmem:[%s142 + $0x440] sm:$0xff]
        %v303 = vld [vmem:[%s142 + $0x448] sm:$0xff]
        %v304 = vld [vmem:[%s142 + $0x450] sm:$0xff]
        %v305 = vld [vmem:[%s142 + $0x458] sm:$0xff]
        %v306 = vld [vmem:[%s142 + $0x460] sm:$0xff]
        %v307 = vld [vmem:[%s142 + $0x468] sm:$0xff]
        %v308 = vld [vmem:[%s142 + $0x470] sm:$0xff]
        %v309 = vld [vmem:[%s142 + $0x478] sm:$0xff]
        %v310 = vld [vmem:[%s142 + $0x480] sm:$0xff]
        %v311 = vld [vmem:[%s142 + $0x488] sm:$0xff]
        %v312 = vld [vmem:[%s142 + $0x490] sm:$0xff]
        %v313 = vld [vmem:[%s142 + $0x498] sm:$0xff]
        %v314 = vld [vmem:[%s142 + $0x4a0] sm:$0xff]
        %v315 = vld [vmem:[%s142 + $0x4a8] sm:$0xff]
        %v316 = vld [vmem:[%s142 + $0x4b0] sm:$0xff]
        %v317 = vld [vmem:[%s142 + $0x4b8] sm:$0xff]
        %v318 = vld [vmem:[%s142 + $0x4c0] sm:$0xff]
        %v319 = vld [vmem:[%s142 + $0x4c8] sm:$0xff]
        %v320 = vld [vmem:[%s142 + $0x4d0] sm:$0xff]
        %v321 = vld [vmem:[%s142 + $0x4d8] sm:$0xff]
        %v322 = vld [vmem:[%s142 + $0x4e0] sm:$0xff]
        %v323 = vld [vmem:[%s142 + $0x4e8] sm:$0xff]
        %v324 = vld [vmem:[%s142 + $0x4f0] sm:$0xff]
        %v325 = vld [vmem:[%s142 + $0x4f8] sm:$0xff]
        %v326 = vld [vmem:[%s142 + $0x500] sm:$0xff]
        %v327 = vld [vmem:[%s142 + $0x508] sm:$0xff]
        %v328 = vld [vmem:[%s142 + $0x510] sm:$0xff]
        %v329 = vld [vmem:[%s142 + $0x518] sm:$0xff]
        %v330 = vld [vmem:[%s142 + $0x520] sm:$0xff]
        %v331 = vld [vmem:[%s142 + $0x528] sm:$0xff]
        %v332 = vld [vmem:[%s142 + $0x530] sm:$0xff]
        %v333 = vld [vmem:[%s142 + $0x538] sm:$0xff]
        %v334 = vld [vmem:[%s142 + $0x540] sm:$0xff]
        %v335 = vld [vmem:[%s142 + $0x548] sm:$0xff]
        %v336 = vld [vmem:[%s142 + $0x550] sm:$0xff]
        %v337 = vld [vmem:[%s142 + $0x558] sm:$0xff]
        %v338 = vld [vmem:[%s142 + $0x560] sm:$0xff]
        %v339 = vld [vmem:[%s142 + $0x568] sm:$0xff]
        %v340 = vld [vmem:[%s142 + $0x570] sm:$0xff]
        %v341 = vld [vmem:[%s142 + $0x578] sm:$0xff]
        %v342 = vld [vmem:[%s142 + $0x580] sm:$0xff]
        %v343 = vld [vmem:[%s142 + $0x588] sm:$0xff]
        %v344 = vld [vmem:[%s142 + $0x590] sm:$0xff]
        %v345 = vld [vmem:[%s142 + $0x598] sm:$0xff]
        %v346 = vld [vmem:[%s142 + $0x5a0] sm:$0xff]
        %v347 = vld [vmem:[%s142 + $0x5a8] sm:$0xff]
        %v348 = vld [vmem:[%s142 + $0x5b0] sm:$0xff]
        %v349 = vld [vmem:[%s142 + $0x5b8] sm:$0xff]
        %v350 = vld [vmem:[%s142 + $0x5c0] sm:$0xff]
        %v351 = vld [vmem:[%s142 + $0x5c8] sm:$0xff]
        %v352 = vld [vmem:[%s142 + $0x5d0] sm:$0xff]
        %v353 = vld [vmem:[%s142 + $0x5d8] sm:$0xff]
        %v354 = vld [vmem:[%s142 + $0x5e0] sm:$0xff]
        %v355 = vld [vmem:[%s142 + $0x5e8] sm:$0xff]
        %v356 = vld [vmem:[%s142 + $0x5f0] sm:$0xff]
        %v357 = vld [vmem:[%s142 + $0x5f8] sm:$0xff]
        %v358 = vld [vmem:[%s142 + $0x600] sm:$0xff]
        %v359 = vld [vmem:[%s142 + $0x608] sm:$0xff]
        %v360 = vld [vmem:[%s142 + $0x610] sm:$0xff]
        %v361 = vld [vmem:[%s142 + $0x618] sm:$0xff]
        %v362 = vld [vmem:[%s142 + $0x620] sm:$0xff]
        %v363 = vld [vmem:[%s142 + $0x628] sm:$0xff]
        %v364 = vld [vmem:[%s142 + $0x630] sm:$0xff]
        %v365 = vld [vmem:[%s142 + $0x638] sm:$0xff]
        %v366 = vld [vmem:[%s142 + $0x640] sm:$0xff]
        %v367 = vld [vmem:[%s142 + $0x648] sm:$0xff]
        %v368 = vld [vmem:[%s142 + $0x650] sm:$0xff]
        %v369 = vld [vmem:[%s142 + $0x658] sm:$0xff]
        %v370 = vld [vmem:[%s142 + $0x660] sm:$0xff]
        %v371 = vld [vmem:[%s142 + $0x668] sm:$0xff]
        %v372 = vld [vmem:[%s142 + $0x670] sm:$0xff]
        %v373 = vld [vmem:[%s142 + $0x678] sm:$0xff]
        %v374 = vld [vmem:[%s142 + $0x680] sm:$0xff]
        %v375 = vld [vmem:[%s142 + $0x688] sm:$0xff]
        %v376 = vld [vmem:[%s142 + $0x690] sm:$0xff]
        %v377 = vld [vmem:[%s142 + $0x698] sm:$0xff]
        %v378 = vld [vmem:[%s142 + $0x6a0] sm:$0xff]
        %v379 = vld [vmem:[%s142 + $0x6a8] sm:$0xff]
        %v380 = vld [vmem:[%s142 + $0x6b0] sm:$0xff]
        %v381 = vld [vmem:[%s142 + $0x6b8] sm:$0xff]
        %v382 = vld [vmem:[%s142 + $0x6c0] sm:$0xff]
        %v383 = vld [vmem:[%s142 + $0x6c8] sm:$0xff]
        %v384 = vld [vmem:[%s142 + $0x6d0] sm:$0xff]
        %v385 = vld [vmem:[%s142 + $0x6d8] sm:$0xff]
        %v386 = vld [vmem:[%s142 + $0x6e0] sm:$0xff]
        %v387 = vld [vmem:[%s142 + $0x6e8] sm:$0xff]
        %v388 = vld [vmem:[%s142 + $0x6f0] sm:$0xff]
        %v389 = vld [vmem:[%s142 + $0x6f8] sm:$0xff]
        %v390 = vld [vmem:[%s142 + $0x700] sm:$0xff]
        %v391 = vld [vmem:[%s142 + $0x708] sm:$0xff]
        %v392 = vld [vmem:[%s142 + $0x710] sm:$0xff]
        %v393 = vld [vmem:[%s142 + $0x718] sm:$0xff]
        %v394 = vld [vmem:[%s142 + $0x720] sm:$0xff]
        %v395 = vld [vmem:[%s142 + $0x728] sm:$0xff]
        %v396 = vld [vmem:[%s142 + $0x730] sm:$0xff]
        %v397 = vld [vmem:[%s142 + $0x738] sm:$0xff]
        %v398 = vld [vmem:[%s142 + $0x740] sm:$0xff]
        %v399 = vld [vmem:[%s142 + $0x748] sm:$0xff]
        %v400 = vld [vmem:[%s142 + $0x750] sm:$0xff]
        %v401 = vld [vmem:[%s142 + $0x758] sm:$0xff]
        %v402 = vld [vmem:[%s142 + $0x760] sm:$0xff]
        %v403 = vld [vmem:[%s142 + $0x768] sm:$0xff]
        %v404 = vld [vmem:[%s142 + $0x770] sm:$0xff]
        %v405 = vld [vmem:[%s142 + $0x778] sm:$0xff]
        %v406 = vld [vmem:[%s142 + $0x780] sm:$0xff]
        %v407 = vld [vmem:[%s142 + $0x788] sm:$0xff]
        %v408 = vld [vmem:[%s142 + $0x790] sm:$0xff]
        %v409 = vld [vmem:[%s142 + $0x798] sm:$0xff]
        %v410 = vld [vmem:[%s142 + $0x7a0] sm:$0xff]
        %v411 = vld [vmem:[%s142 + $0x7a8] sm:$0xff]
        %v412 = vld [vmem:[%s142 + $0x7b0] sm:$0xff]
        %v413 = vld [vmem:[%s142 + $0x7b8] sm:$0xff]
        %v414 = vld [vmem:[%s142 + $0x7c0] sm:$0xff]
        %v415 = vld [vmem:[%s142 + $0x7c8] sm:$0xff]
        %v416 = vld [vmem:[%s142 + $0x7d0] sm:$0xff]
        %v417 = vld [vmem:[%s142 + $0x7d8] sm:$0xff]
        %v418 = vld [vmem:[%s142 + $0x7e0] sm:$0xff]
        %v419 = vld [vmem:[%s142 + $0x7e8] sm:$0xff]
        %v420 = vld [vmem:[%s142 + $0x7f0] sm:$0xff]
        %v421 = vld [vmem:[%s142 + $0x7f8] sm:$0xff]
        %v422 = vstv %s165
        %v423 = vmul.f32 %v166, %v422
        %v424 = vmul.f32 %v167, %v422
        %v425 = vmul.f32 %v168, %v422
        %v426 = vmul.f32 %v169, %v422
        %v427 = vmul.f32 %v170, %v422
        %v428 = vmul.f32 %v171, %v422
        %v429 = vmul.f32 %v172, %v422
        %v430 = vmul.f32 %v173, %v422
        %v431 = vmul.f32 %v174, %v422
        %v432 = vmul.f32 %v175, %v422
        %v433 = vmul.f32 %v176, %v422
        %v434 = vmul.f32 %v177, %v422
        %v435 = vmul.f32 %v178, %v422
        %v436 = vmul.f32 %v179, %v422
        %v437 = vmul.f32 %v180, %v422
        %v438 = vmul.f32 %v181, %v422
        %v439 = vmul.f32 %v182, %v422
        %v440 = vmul.f32 %v183, %v422
        %v441 = vmul.f32 %v184, %v422
        %v442 = vmul.f32 %v185, %v422
        %v443 = vmul.f32 %v186, %v422
        %v444 = vmul.f32 %v187, %v422
        %v445 = vmul.f32 %v188, %v422
        %v446 = vmul.f32 %v189, %v422
        %v447 = vmul.f32 %v190, %v422
        %v448 = vmul.f32 %v191, %v422
        %v449 = vmul.f32 %v192, %v422
        %v450 = vmul.f32 %v193, %v422
        %v451 = vmul.f32 %v194, %v422
        %v452 = vmul.f32 %v195, %v422
        %v453 = vmul.f32 %v196, %v422
        %v454 = vmul.f32 %v197, %v422
        %v455 = vmul.f32 %v198, %v422
        %v456 = vmul.f32 %v199, %v422
        %v457 = vmul.f32 %v200, %v422
        %v458 = vmul.f32 %v201, %v422
        %v459 = vmul.f32 %v202, %v422
        %v460 = vmul.f32 %v203, %v422
        %v461 = vmul.f32 %v204, %v422
        %v462 = vmul.f32 %v205, %v422
        %v463 = vmul.f32 %v206, %v422
        %v464 = vmul.f32 %v207, %v422
        %v465 = vmul.f32 %v208, %v422
        %v466 = vmul.f32 %v209, %v422
        %v467 = vmul.f32 %v210, %v422
        %v468 = vmul.f32 %v211, %v422
        %v469 = vmul.f32 %v212, %v422
        %v470 = vmul.f32 %v213, %v422
        %v471 = vmul.f32 %v214, %v422
        %v472 = vmul.f32 %v215, %v422
        %v473 = vmul.f32 %v216, %v422
        %v474 = vmul.f32 %v217, %v422
        %v475 = vmul.f32 %v218, %v422
        %v476 = vmul.f32 %v219, %v422
        %v477 = vmul.f32 %v220, %v422
        %v478 = vmul.f32 %v221, %v422
        %v479 = vmul.f32 %v222, %v422
        %v480 = vmul.f32 %v223, %v422
        %v481 = vmul.f32 %v224, %v422
        %v482 = vmul.f32 %v225, %v422
        %v483 = vmul.f32 %v226, %v422
        %v484 = vmul.f32 %v227, %v422
        %v485 = vmul.f32 %v228, %v422
        %v486 = vmul.f32 %v229, %v422
        %v487 = vmul.f32 %v230, %v422
        %v488 = vmul.f32 %v231, %v422
        %v489 = vmul.f32 %v232, %v422
        %v490 = vmul.f32 %v233, %v422
        %v491 = vmul.f32 %v234, %v422
        %v492 = vmul.f32 %v235, %v422
        %v493 = vmul.f32 %v236, %v422
        %v494 = vmul.f32 %v237, %v422
        %v495 = vmul.f32 %v238, %v422
        %v496 = vmul.f32 %v239, %v422
        %v497 = vmul.f32 %v240, %v422
        %v498 = vmul.f32 %v241, %v422
        %v499 = vmul.f32 %v242, %v422
        %v500 = vmul.f32 %v243, %v422
        %v501 = vmul.f32 %v244, %v422
        %v502 = vmul.f32 %v245, %v422
        %v503 = vmul.f32 %v246, %v422
        %v504 = vmul.f32 %v247, %v422
        %v505 = vmul.f32 %v248, %v422
        %v506 = vmul.f32 %v249, %v422
        %v507 = vmul.f32 %v250, %v422
        %v508 = vmul.f32 %v251, %v422
        %v509 = vmul.f32 %v252, %v422
        %v510 = vmul.f32 %v253, %v422
        %v511 = vmul.f32 %v254, %v422
        %v512 = vmul.f32 %v255, %v422
        %v513 = vmul.f32 %v256, %v422
        %v514 = vmul.f32 %v257, %v422
        %v515 = vmul.f32 %v258, %v422
        %v516 = vmul.f32 %v259, %v422
        %v517 = vmul.f32 %v260, %v422
        %v518 = vmul.f32 %v261, %v422
        %v519 = vmul.f32 %v262, %v422
        %v520 = vmul.f32 %v263, %v422
        %v521 = vmul.f32 %v264, %v422
        %v522 = vmul.f32 %v265, %v422
        %v523 = vmul.f32 %v266, %v422
        %v524 = vmul.f32 %v267, %v422
        %v525 = vmul.f32 %v268, %v422
        %v526 = vmul.f32 %v269, %v422
        %v527 = vmul.f32 %v270, %v422
        %v528 = vmul.f32 %v271, %v422
        %v529 = vmul.f32 %v272, %v422
        %v530 = vmul.f32 %v273, %v422
        %v531 = vmul.f32 %v274, %v422
        %v532 = vmul.f32 %v275, %v422
        %v533 = vmul.f32 %v276, %v422
        %v534 = vmul.f32 %v277, %v422
        %v535 = vmul.f32 %v278, %v422
        %v536 = vmul.f32 %v279, %v422
        %v537 = vmul.f32 %v280, %v422
        %v538 = vmul.f32 %v281, %v422
        %v539 = vmul.f32 %v282, %v422
        %v540 = vmul.f32 %v283, %v422
        %v541 = vmul.f32 %v284, %v422
        %v542 = vmul.f32 %v285, %v422
        %v543 = vmul.f32 %v286, %v422
        %v544 = vmul.f32 %v287, %v422
        %v545 = vmul.f32 %v288, %v422
        %v546 = vmul.f32 %v289, %v422
        %v547 = vmul.f32 %v290, %v422
        %v548 = vmul.f32 %v291, %v422
        %v549 = vmul.f32 %v292, %v422
        %v550 = vmul.f32 %v293, %v422
        %v551 = vmul.f32 %v294, %v422
        %v552 = vmul.f32 %v295, %v422
        %v553 = vmul.f32 %v296, %v422
        %v554 = vmul.f32 %v297, %v422
        %v555 = vmul.f32 %v298, %v422
        %v556 = vmul.f32 %v299, %v422
        %v557 = vmul.f32 %v300, %v422
        %v558 = vmul.f32 %v301, %v422
        %v559 = vmul.f32 %v302, %v422
        %v560 = vmul.f32 %v303, %v422
        %v561 = vmul.f32 %v304, %v422
        %v562 = vmul.f32 %v305, %v422
        %v563 = vmul.f32 %v306, %v422
        %v564 = vmul.f32 %v307, %v422
        %v565 = vmul.f32 %v308, %v422
        %v566 = vmul.f32 %v309, %v422
        %v567 = vmul.f32 %v310, %v422
        %v568 = vmul.f32 %v311, %v422
        %v569 = vmul.f32 %v312, %v422
        %v570 = vmul.f32 %v313, %v422
        %v571 = vmul.f32 %v314, %v422
        %v572 = vmul.f32 %v315, %v422
        %v573 = vmul.f32 %v316, %v422
        %v574 = vmul.f32 %v317, %v422
        %v575 = vmul.f32 %v318, %v422
        %v576 = vmul.f32 %v319, %v422
        %v577 = vmul.f32 %v320, %v422
        %v578 = vmul.f32 %v321, %v422
        %v579 = vmul.f32 %v322, %v422
        %v580 = vmul.f32 %v323, %v422
        %v581 = vmul.f32 %v324, %v422
        %v582 = vmul.f32 %v325, %v422
        %v583 = vmul.f32 %v326, %v422
        %v584 = vmul.f32 %v327, %v422
        %v585 = vmul.f32 %v328, %v422
        %v586 = vmul.f32 %v329, %v422
        %v587 = vmul.f32 %v330, %v422
        %v588 = vmul.f32 %v331, %v422
        %v589 = vmul.f32 %v332, %v422
        %v590 = vmul.f32 %v333, %v422
        %v591 = vmul.f32 %v334, %v422
        %v592 = vmul.f32 %v335, %v422
        %v593 = vmul.f32 %v336, %v422
        %v594 = vmul.f32 %v337, %v422
        %v595 = vmul.f32 %v338, %v422
        %v596 = vmul.f32 %v339, %v422
        %v597 = vmul.f32 %v340, %v422
        %v598 = vmul.f32 %v341, %v422
        %v599 = vmul.f32 %v342, %v422
        %v600 = vmul.f32 %v343, %v422
        %v601 = vmul.f32 %v344, %v422
        %v602 = vmul.f32 %v345, %v422
        %v603 = vmul.f32 %v346, %v422
        %v604 = vmul.f32 %v347, %v422
        %v605 = vmul.f32 %v348, %v422
        %v606 = vmul.f32 %v349, %v422
        %v607 = vmul.f32 %v350, %v422
        %v608 = vmul.f32 %v351, %v422
        %v609 = vmul.f32 %v352, %v422
        %v610 = vmul.f32 %v353, %v422
        %v611 = vmul.f32 %v354, %v422
        %v612 = vmul.f32 %v355, %v422
        %v613 = vmul.f32 %v356, %v422
        %v614 = vmul.f32 %v357, %v422
        %v615 = vmul.f32 %v358, %v422
        %v616 = vmul.f32 %v359, %v422
        %v617 = vmul.f32 %v360, %v422
        %v618 = vmul.f32 %v361, %v422
        %v619 = vmul.f32 %v362, %v422
        %v620 = vmul.f32 %v363, %v422
        %v621 = vmul.f32 %v364, %v422
        %v622 = vmul.f32 %v365, %v422
        %v623 = vmul.f32 %v366, %v422
        %v624 = vmul.f32 %v367, %v422
        %v625 = vmul.f32 %v368, %v422
        %v626 = vmul.f32 %v369, %v422
        %v627 = vmul.f32 %v370, %v422
        %v628 = vmul.f32 %v371, %v422
        %v629 = vmul.f32 %v372, %v422
        %v630 = vmul.f32 %v373, %v422
        %v631 = vmul.f32 %v374, %v422
        %v632 = vmul.f32 %v375, %v422
        %v633 = vmul.f32 %v376, %v422
        %v634 = vmul.f32 %v377, %v422
        %v635 = vmul.f32 %v378, %v422
        %v636 = vmul.f32 %v379, %v422
        %v637 = vmul.f32 %v380, %v422
        %v638 = vmul.f32 %v381, %v422
        %v639 = vmul.f32 %v382, %v422
        %v640 = vmul.f32 %v383, %v422
        %v641 = vmul.f32 %v384, %v422
        %v642 = vmul.f32 %v385, %v422
        %v643 = vmul.f32 %v386, %v422
        %v644 = vmul.f32 %v387, %v422
        %v645 = vmul.f32 %v388, %v422
        %v646 = vmul.f32 %v389, %v422
        %v647 = vmul.f32 %v390, %v422
        %v648 = vmul.f32 %v391, %v422
        %v649 = vmul.f32 %v392, %v422
        %v650 = vmul.f32 %v393, %v422
        %v651 = vmul.f32 %v394, %v422
        %v652 = vmul.f32 %v395, %v422
        %v653 = vmul.f32 %v396, %v422
        %v654 = vmul.f32 %v397, %v422
        %v655 = vmul.f32 %v398, %v422
        %v656 = vmul.f32 %v399, %v422
        %v657 = vmul.f32 %v400, %v422
        %v658 = vmul.f32 %v401, %v422
        %v659 = vmul.f32 %v402, %v422
        %v660 = vmul.f32 %v403, %v422
        %v661 = vmul.f32 %v404, %v422
        %v662 = vmul.f32 %v405, %v422
        %v663 = vmul.f32 %v406, %v422
        %v664 = vmul.f32 %v407, %v422
        %v665 = vmul.f32 %v408, %v422
        %v666 = vmul.f32 %v409, %v422
        %v667 = vmul.f32 %v410, %v422
        %v668 = vmul.f32 %v411, %v422
        %v669 = vmul.f32 %v412, %v422
        %v670 = vmul.f32 %v413, %v422
        %v671 = vmul.f32 %v414, %v422
        %v672 = vmul.f32 %v415, %v422
        %v673 = vmul.f32 %v416, %v422
        %v674 = vmul.f32 %v417, %v422
        %v675 = vmul.f32 %v418, %v422
        %v676 = vmul.f32 %v419, %v422
        %v677 = vmul.f32 %v420, %v422
        %v678 = vmul.f32 %v421, %v422
        %v679 = vsub.f32 %v423, %v166
        %v680 = vsub.f32 %v424, %v167
        %v681 = vsub.f32 %v425, %v168
        %v682 = vsub.f32 %v426, %v169
        %v683 = vsub.f32 %v427, %v170
        %v684 = vsub.f32 %v428, %v171
        %v685 = vsub.f32 %v429, %v172
        %v686 = vsub.f32 %v430, %v173
        %v687 = vsub.f32 %v431, %v174
        %v688 = vsub.f32 %v432, %v175
        %v689 = vsub.f32 %v433, %v176
        %v690 = vsub.f32 %v434, %v177
        %v691 = vsub.f32 %v435, %v178
        %v692 = vsub.f32 %v436, %v179
        %v693 = vsub.f32 %v437, %v180
        %v694 = vsub.f32 %v438, %v181
        %v695 = vsub.f32 %v439, %v182
        %v696 = vsub.f32 %v440, %v183
        %v697 = vsub.f32 %v441, %v184
        %v698 = vsub.f32 %v442, %v185
        %v699 = vsub.f32 %v443, %v186
        %v700 = vsub.f32 %v444, %v187
        %v701 = vsub.f32 %v445, %v188
        %v702 = vsub.f32 %v446, %v189
        %v703 = vsub.f32 %v447, %v190
        %v704 = vsub.f32 %v448, %v191
        %v705 = vsub.f32 %v449, %v192
        %v706 = vsub.f32 %v450, %v193
        %v707 = vsub.f32 %v451, %v194
        %v708 = vsub.f32 %v452, %v195
        %v709 = vsub.f32 %v453, %v196
        %v710 = vsub.f32 %v454, %v197
        %v711 = vsub.f32 %v455, %v198
        %v712 = vsub.f32 %v456, %v199
        %v713 = vsub.f32 %v457, %v200
        %v714 = vsub.f32 %v458, %v201
        %v715 = vsub.f32 %v459, %v202
        %v716 = vsub.f32 %v460, %v203
        %v717 = vsub.f32 %v461, %v204
        %v718 = vsub.f32 %v462, %v205
        %v719 = vsub.f32 %v463, %v206
        %v720 = vsub.f32 %v464, %v207
        %v721 = vsub.f32 %v465, %v208
        %v722 = vsub.f32 %v466, %v209
        %v723 = vsub.f32 %v467, %v210
        %v724 = vsub.f32 %v468, %v211
        %v725 = vsub.f32 %v469, %v212
        %v726 = vsub.f32 %v470, %v213
        %v727 = vsub.f32 %v471, %v214
        %v728 = vsub.f32 %v472, %v215
        %v729 = vsub.f32 %v473, %v216
        %v730 = vsub.f32 %v474, %v217
        %v731 = vsub.f32 %v475, %v218
        %v732 = vsub.f32 %v476, %v219
        %v733 = vsub.f32 %v477, %v220
        %v734 = vsub.f32 %v478, %v221
        %v735 = vsub.f32 %v479, %v222
        %v736 = vsub.f32 %v480, %v223
        %v737 = vsub.f32 %v481, %v224
        %v738 = vsub.f32 %v482, %v225
        %v739 = vsub.f32 %v483, %v226
        %v740 = vsub.f32 %v484, %v227
        %v741 = vsub.f32 %v485, %v228
        %v742 = vsub.f32 %v486, %v229
        %v743 = vsub.f32 %v487, %v230
        %v744 = vsub.f32 %v488, %v231
        %v745 = vsub.f32 %v489, %v232
        %v746 = vsub.f32 %v490, %v233
        %v747 = vsub.f32 %v491, %v234
        %v748 = vsub.f32 %v492, %v235
        %v749 = vsub.f32 %v493, %v236
        %v750 = vsub.f32 %v494, %v237
        %v751 = vsub.f32 %v495, %v238
        %v752 = vsub.f32 %v496, %v239
        %v753 = vsub.f32 %v497, %v240
        %v754 = vsub.f32 %v498, %v241
        %v755 = vsub.f32 %v499, %v242
        %v756 = vsub.f32 %v500, %v243
        %v757 = vsub.f32 %v501, %v244
        %v758 = vsub.f32 %v502, %v245
        %v759 = vsub.f32 %v503, %v246
        %v760 = vsub.f32 %v504, %v247
        %v761 = vsub.f32 %v505, %v248
        %v762 = vsub.f32 %v506, %v249
        %v763 = vsub.f32 %v507, %v250
        %v764 = vsub.f32 %v508, %v251
        %v765 = vsub.f32 %v509, %v252
        %v766 = vsub.f32 %v510, %v253
        %v767 = vsub.f32 %v511, %v254
        %v768 = vsub.f32 %v512, %v255
        %v769 = vsub.f32 %v513, %v256
        %v770 = vsub.f32 %v514, %v257
        %v771 = vsub.f32 %v515, %v258
        %v772 = vsub.f32 %v516, %v259
        %v773 = vsub.f32 %v517, %v260
        %v774 = vsub.f32 %v518, %v261
        %v775 = vsub.f32 %v519, %v262
        %v776 = vsub.f32 %v520, %v263
        %v777 = vsub.f32 %v521, %v264
        %v778 = vsub.f32 %v522, %v265
        %v779 = vsub.f32 %v523, %v266
        %v780 = vsub.f32 %v524, %v267
        %v781 = vsub.f32 %v525, %v268
        %v782 = vsub.f32 %v526, %v269
        %v783 = vsub.f32 %v527, %v270
        %v784 = vsub.f32 %v528, %v271
        %v785 = vsub.f32 %v529, %v272
        %v786 = vsub.f32 %v530, %v273
        %v787 = vsub.f32 %v531, %v274
        %v788 = vsub.f32 %v532, %v275
        %v789 = vsub.f32 %v533, %v276
        %v790 = vsub.f32 %v534, %v277
        %v791 = vsub.f32 %v535, %v278
        %v792 = vsub.f32 %v536, %v279
        %v793 = vsub.f32 %v537, %v280
        %v794 = vsub.f32 %v538, %v281
        %v795 = vsub.f32 %v539, %v282
        %v796 = vsub.f32 %v540, %v283
        %v797 = vsub.f32 %v541, %v284
        %v798 = vsub.f32 %v542, %v285
        %v799 = vsub.f32 %v543, %v286
        %v800 = vsub.f32 %v544, %v287
        %v801 = vsub.f32 %v545, %v288
        %v802 = vsub.f32 %v546, %v289
        %v803 = vsub.f32 %v547, %v290
        %v804 = vsub.f32 %v548, %v291
        %v805 = vsub.f32 %v549, %v292
        %v806 = vsub.f32 %v550, %v293
        %v807 = vsub.f32 %v551, %v294
        %v808 = vsub.f32 %v552, %v295
        %v809 = vsub.f32 %v553, %v296
        %v810 = vsub.f32 %v554, %v297
        %v811 = vsub.f32 %v555, %v298
        %v812 = vsub.f32 %v556, %v299
        %v813 = vsub.f32 %v557, %v300
        %v814 = vsub.f32 %v558, %v301
        %v815 = vsub.f32 %v559, %v302
        %v816 = vsub.f32 %v560, %v303
        %v817 = vsub.f32 %v561, %v304
        %v818 = vsub.f32 %v562, %v305
        %v819 = vsub.f32 %v563, %v306
        %v820 = vsub.f32 %v564, %v307
        %v821 = vsub.f32 %v565, %v308
        %v822 = vsub.f32 %v566, %v309
        %v823 = vsub.f32 %v567, %v310
        %v824 = vsub.f32 %v568, %v311
        %v825 = vsub.f32 %v569, %v312
        %v826 = vsub.f32 %v570, %v313
        %v827 = vsub.f32 %v571, %v314
        %v828 = vsub.f32 %v572, %v315
        %v829 = vsub.f32 %v573, %v316
        %v830 = vsub.f32 %v574, %v317
        %v831 = vsub.f32 %v575, %v318
        %v832 = vsub.f32 %v576, %v319
        %v833 = vsub.f32 %v577, %v320
        %v834 = vsub.f32 %v578, %v321
        %v835 = vsub.f32 %v579, %v322
        %v836 = vsub.f32 %v580, %v323
        %v837 = vsub.f32 %v581, %v324
        %v838 = vsub.f32 %v582, %v325
        %v839 = vsub.f32 %v583, %v326
        %v840 = vsub.f32 %v584, %v327
        %v841 = vsub.f32 %v585, %v328
        %v842 = vsub.f32 %v586, %v329
        %v843 = vsub.f32 %v587, %v330
        %v844 = vsub.f32 %v588, %v331
        %v845 = vsub.f32 %v589, %v332
        %v846 = vsub.f32 %v590, %v333
        %v847 = vsub.f32 %v591, %v334
        %v848 = vsub.f32 %v592, %v335
        %v849 = vsub.f32 %v593, %v336
        %v850 = vsub.f32 %v594, %v337
        %v851 = vsub.f32 %v595, %v338
        %v852 = vsub.f32 %v596, %v339
        %v853 = vsub.f32 %v597, %v340
        %v854 = vsub.f32 %v598, %v341
        %v855 = vsub.f32 %v599, %v342
        %v856 = vsub.f32 %v600, %v343
        %v857 = vsub.f32 %v601, %v344
        %v858 = vsub.f32 %v602, %v345
        %v859 = vsub.f32 %v603, %v346
        %v860 = vsub.f32 %v604, %v347
        %v861 = vsub.f32 %v605, %v348
        %v862 = vsub.f32 %v606, %v349
        %v863 = vsub.f32 %v607, %v350
        %v864 = vsub.f32 %v608, %v351
        %v865 = vsub.f32 %v609, %v352
        %v866 = vsub.f32 %v610, %v353
        %v867 = vsub.f32 %v611, %v354
        %v868 = vsub.f32 %v612, %v355
        %v869 = vsub.f32 %v613, %v356
        %v870 = vsub.f32 %v614, %v357
        %v871 = vsub.f32 %v615, %v358
        %v872 = vsub.f32 %v616, %v359
        %v873 = vsub.f32 %v617, %v360
        %v874 = vsub.f32 %v618, %v361
        %v875 = vsub.f32 %v619, %v362
        %v876 = vsub.f32 %v620, %v363
        %v877 = vsub.f32 %v621, %v364
        %v878 = vsub.f32 %v622, %v365
        %v879 = vsub.f32 %v623, %v366
        %v880 = vsub.f32 %v624, %v367
        %v881 = vsub.f32 %v625, %v368
        %v882 = vsub.f32 %v626, %v369
        %v883 = vsub.f32 %v627, %v370
        %v884 = vsub.f32 %v628, %v371
        %v885 = vsub.f32 %v629, %v372
        %v886 = vsub.f32 %v630, %v373
        %v887 = vsub.f32 %v631, %v374
        %v888 = vsub.f32 %v632, %v375
        %v889 = vsub.f32 %v633, %v376
        %v890 = vsub.f32 %v634, %v377
        %v891 = vsub.f32 %v635, %v378
        %v892 = vsub.f32 %v636, %v379
        %v893 = vsub.f32 %v637, %v380
        %v894 = vsub.f32 %v638, %v381
        %v895 = vsub.f32 %v639, %v382
        %v896 = vsub.f32 %v640, %v383
        %v897 = vsub.f32 %v641, %v384
        %v898 = vsub.f32 %v642, %v385
        %v899 = vsub.f32 %v643, %v386
        %v900 = vsub.f32 %v644, %v387
        %v901 = vsub.f32 %v645, %v388
        %v902 = vsub.f32 %v646, %v389
        %v903 = vsub.f32 %v647, %v390
        %v904 = vsub.f32 %v648, %v391
        %v905 = vsub.f32 %v649, %v392
        %v906 = vsub.f32 %v650, %v393
        %v907 = vsub.f32 %v651, %v394
        %v908 = vsub.f32 %v652, %v395
        %v909 = vsub.f32 %v653, %v396
        %v910 = vsub.f32 %v654, %v397
        %v911 = vsub.f32 %v655, %v398
        %v912 = vsub.f32 %v656, %v399
        %v913 = vsub.f32 %v657, %v400
        %v914 = vsub.f32 %v658, %v401
        %v915 = vsub.f32 %v659, %v402
        %v916 = vsub.f32 %v660, %v403
        %v917 = vsub.f32 %v661, %v404
        %v918 = vsub.f32 %v662, %v405
        %v919 = vsub.f32 %v663, %v406
        %v920 = vsub.f32 %v664, %v407
        %v921 = vsub.f32 %v665, %v408
        %v922 = vsub.f32 %v666, %v409
        %v923 = vsub.f32 %v667, %v410
        %v924 = vsub.f32 %v668, %v411
        %v925 = vsub.f32 %v669, %v412
        %v926 = vsub.f32 %v670, %v413
        %v927 = vsub.f32 %v671, %v414
        %v928 = vsub.f32 %v672, %v415
        %v929 = vsub.f32 %v673, %v416
        %v930 = vsub.f32 %v674, %v417
        %v931 = vsub.f32 %v675, %v418
        %v932 = vsub.f32 %v676, %v419
        %v933 = vsub.f32 %v677, %v420
        %v934 = vsub.f32 %v678, %v421
        %v935 = vand.u32 2147483647, %v679
        %v936 = vand.u32 2147483647, %v680
        %v937 = vand.u32 2147483647, %v681
        %v938 = vand.u32 2147483647, %v682
        %v939 = vand.u32 2147483647, %v683
        %v940 = vand.u32 2147483647, %v684
        %v941 = vand.u32 2147483647, %v685
        %v942 = vand.u32 2147483647, %v686
        %v943 = vand.u32 2147483647, %v687
        %v944 = vand.u32 2147483647, %v688
        %v945 = vand.u32 2147483647, %v689
        %v946 = vand.u32 2147483647, %v690
        %v947 = vand.u32 2147483647, %v691
        %v948 = vand.u32 2147483647, %v692
        %v949 = vand.u32 2147483647, %v693
        %v950 = vand.u32 2147483647, %v694
        %v951 = vand.u32 2147483647, %v695
        %v952 = vand.u32 2147483647, %v696
        %v953 = vand.u32 2147483647, %v697
        %v954 = vand.u32 2147483647, %v698
        %v955 = vand.u32 2147483647, %v699
        %v956 = vand.u32 2147483647, %v700
        %v957 = vand.u32 2147483647, %v701
        %v958 = vand.u32 2147483647, %v702
        %v959 = vand.u32 2147483647, %v703
        %v960 = vand.u32 2147483647, %v704
        %v961 = vand.u32 2147483647, %v705
        %v962 = vand.u32 2147483647, %v706
        %v963 = vand.u32 2147483647, %v707
        %v964 = vand.u32 2147483647, %v708
        %v965 = vand.u32 2147483647, %v709
        %v966 = vand.u32 2147483647, %v710
        %v967 = vand.u32 2147483647, %v711
        %v968 = vand.u32 2147483647, %v712
        %v969 = vand.u32 2147483647, %v713
        %v970 = vand.u32 2147483647, %v714
        %v971 = vand.u32 2147483647, %v715
        %v972 = vand.u32 2147483647, %v716
        %v973 = vand.u32 2147483647, %v717
        %v974 = vand.u32 2147483647, %v718
        %v975 = vand.u32 2147483647, %v719
        %v976 = vand.u32 2147483647, %v720
        %v977 = vand.u32 2147483647, %v721
        %v978 = vand.u32 2147483647, %v722
        %v979 = vand.u32 2147483647, %v723
        %v980 = vand.u32 2147483647, %v724
        %v981 = vand.u32 2147483647, %v725
        %v982 = vand.u32 2147483647, %v726
        %v983 = vand.u32 2147483647, %v727
        %v984 = vand.u32 2147483647, %v728
        %v985 = vand.u32 2147483647, %v729
        %v986 = vand.u32 2147483647, %v730
        %v987 = vand.u32 2147483647, %v731
        %v988 = vand.u32 2147483647, %v732
        %v989 = vand.u32 2147483647, %v733
        %v990 = vand.u32 2147483647, %v734
        %v991 = vand.u32 2147483647, %v735
        %v992 = vand.u32 2147483647, %v736
        %v993 = vand.u32 2147483647, %v737
        %v994 = vand.u32 2147483647, %v738
        %v995 = vand.u32 2147483647, %v739
        %v996 = vand.u32 2147483647, %v740
        %v997 = vand.u32 2147483647, %v741
        %v998 = vand.u32 2147483647, %v742
        %v999 = vand.u32 2147483647, %v743
        %v1000 = vand.u32 2147483647, %v744
        %v1001 = vand.u32 2147483647, %v745
        %v1002 = vand.u32 2147483647, %v746
        %v1003 = vand.u32 2147483647, %v747
        %v1004 = vand.u32 2147483647, %v748
        %v1005 = vand.u32 2147483647, %v749
        %v1006 = vand.u32 2147483647, %v750
        %v1007 = vand.u32 2147483647, %v751
        %v1008 = vand.u32 2147483647, %v752
        %v1009 = vand.u32 2147483647, %v753
        %v1010 = vand.u32 2147483647, %v754
        %v1011 = vand.u32 2147483647, %v755
        %v1012 = vand.u32 2147483647, %v756
        %v1013 = vand.u32 2147483647, %v757
        %v1014 = vand.u32 2147483647, %v758
        %v1015 = vand.u32 2147483647, %v759
        %v1016 = vand.u32 2147483647, %v760
        %v1017 = vand.u32 2147483647, %v761
        %v1018 = vand.u32 2147483647, %v762
        %v1019 = vand.u32 2147483647, %v763
        %v1020 = vand.u32 2147483647, %v764
        %v1021 = vand.u32 2147483647, %v765
        %v1022 = vand.u32 2147483647, %v766
        %v1023 = vand.u32 2147483647, %v767
        %v1024 = vand.u32 2147483647, %v768
        %v1025 = vand.u32 2147483647, %v769
        %v1026 = vand.u32 2147483647, %v770
        %v1027 = vand.u32 2147483647, %v771
        %v1028 = vand.u32 2147483647, %v772
        %v1029 = vand.u32 2147483647, %v773
        %v1030 = vand.u32 2147483647, %v774
        %v1031 = vand.u32 2147483647, %v775
        %v1032 = vand.u32 2147483647, %v776
        %v1033 = vand.u32 2147483647, %v777
        %v1034 = vand.u32 2147483647, %v778
        %v1035 = vand.u32 2147483647, %v779
        %v1036 = vand.u32 2147483647, %v780
        %v1037 = vand.u32 2147483647, %v781
        %v1038 = vand.u32 2147483647, %v782
        %v1039 = vand.u32 2147483647, %v783
        %v1040 = vand.u32 2147483647, %v784
        %v1041 = vand.u32 2147483647, %v785
        %v1042 = vand.u32 2147483647, %v786
        %v1043 = vand.u32 2147483647, %v787
        %v1044 = vand.u32 2147483647, %v788
        %v1045 = vand.u32 2147483647, %v789
        %v1046 = vand.u32 2147483647, %v790
        %v1047 = vand.u32 2147483647, %v791
        %v1048 = vand.u32 2147483647, %v792
        %v1049 = vand.u32 2147483647, %v793
        %v1050 = vand.u32 2147483647, %v794
        %v1051 = vand.u32 2147483647, %v795
        %v1052 = vand.u32 2147483647, %v796
        %v1053 = vand.u32 2147483647, %v797
        %v1054 = vand.u32 2147483647, %v798
        %v1055 = vand.u32 2147483647, %v799
        %v1056 = vand.u32 2147483647, %v800
        %v1057 = vand.u32 2147483647, %v801
        %v1058 = vand.u32 2147483647, %v802
        %v1059 = vand.u32 2147483647, %v803
        %v1060 = vand.u32 2147483647, %v804
        %v1061 = vand.u32 2147483647, %v805
        %v1062 = vand.u32 2147483647, %v806
        %v1063 = vand.u32 2147483647, %v807
        %v1064 = vand.u32 2147483647, %v808
        %v1065 = vand.u32 2147483647, %v809
        %v1066 = vand.u32 2147483647, %v810
        %v1067 = vand.u32 2147483647, %v811
        %v1068 = vand.u32 2147483647, %v812
        %v1069 = vand.u32 2147483647, %v813
        %v1070 = vand.u32 2147483647, %v814
        %v1071 = vand.u32 2147483647, %v815
        %v1072 = vand.u32 2147483647, %v816
        %v1073 = vand.u32 2147483647, %v817
        %v1074 = vand.u32 2147483647, %v818
        %v1075 = vand.u32 2147483647, %v819
        %v1076 = vand.u32 2147483647, %v820
        %v1077 = vand.u32 2147483647, %v821
        %v1078 = vand.u32 2147483647, %v822
        %v1079 = vand.u32 2147483647, %v823
        %v1080 = vand.u32 2147483647, %v824
        %v1081 = vand.u32 2147483647, %v825
        %v1082 = vand.u32 2147483647, %v826
        %v1083 = vand.u32 2147483647, %v827
        %v1084 = vand.u32 2147483647, %v828
        %v1085 = vand.u32 2147483647, %v829
        %v1086 = vand.u32 2147483647, %v830
        %v1087 = vand.u32 2147483647, %v831
        %v1088 = vand.u32 2147483647, %v832
        %v1089 = vand.u32 2147483647, %v833
        %v1090 = vand.u32 2147483647, %v834
        %v1091 = vand.u32 2147483647, %v835
        %v1092 = vand.u32 2147483647, %v836
        %v1093 = vand.u32 2147483647, %v837
        %v1094 = vand.u32 2147483647, %v838
        %v1095 = vand.u32 2147483647, %v839
        %v1096 = vand.u32 2147483647, %v840
        %v1097 = vand.u32 2147483647, %v841
        %v1098 = vand.u32 2147483647, %v842
        %v1099 = vand.u32 2147483647, %v843
        %v1100 = vand.u32 2147483647, %v844
        %v1101 = vand.u32 2147483647, %v845
        %v1102 = vand.u32 2147483647, %v846
        %v1103 = vand.u32 2147483647, %v847
        %v1104 = vand.u32 2147483647, %v848
        %v1105 = vand.u32 2147483647, %v849
        %v1106 = vand.u32 2147483647, %v850
        %v1107 = vand.u32 2147483647, %v851
        %v1108 = vand.u32 2147483647, %v852
        %v1109 = vand.u32 2147483647, %v853
        %v1110 = vand.u32 2147483647, %v854
        %v1111 = vand.u32 2147483647, %v855
        %v1112 = vand.u32 2147483647, %v856
        %v1113 = vand.u32 2147483647, %v857
        %v1114 = vand.u32 2147483647, %v858
        %v1115 = vand.u32 2147483647, %v859
        %v1116 = vand.u32 2147483647, %v860
        %v1117 = vand.u32 2147483647, %v861
        %v1118 = vand.u32 2147483647, %v862
        %v1119 = vand.u32 2147483647, %v863
        %v1120 = vand.u32 2147483647, %v864
        %v1121 = vand.u32 2147483647, %v865
        %v1122 = vand.u32 2147483647, %v866
        %v1123 = vand.u32 2147483647, %v867
        %v1124 = vand.u32 2147483647, %v868
        %v1125 = vand.u32 2147483647, %v869
        %v1126 = vand.u32 2147483647, %v870
        %v1127 = vand.u32 2147483647, %v871
        %v1128 = vand.u32 2147483647, %v872
        %v1129 = vand.u32 2147483647, %v873
        %v1130 = vand.u32 2147483647, %v874
        %v1131 = vand.u32 2147483647, %v875
        %v1132 = vand.u32 2147483647, %v876
        %v1133 = vand.u32 2147483647, %v877
        %v1134 = vand.u32 2147483647, %v878
        %v1135 = vand.u32 2147483647, %v879
        %v1136 = vand.u32 2147483647, %v880
        %v1137 = vand.u32 2147483647, %v881
        %v1138 = vand.u32 2147483647, %v882
        %v1139 = vand.u32 2147483647, %v883
        %v1140 = vand.u32 2147483647, %v884
        %v1141 = vand.u32 2147483647, %v885
        %v1142 = vand.u32 2147483647, %v886
        %v1143 = vand.u32 2147483647, %v887
        %v1144 = vand.u32 2147483647, %v888
        %v1145 = vand.u32 2147483647, %v889
        %v1146 = vand.u32 2147483647, %v890
        %v1147 = vand.u32 2147483647, %v891
        %v1148 = vand.u32 2147483647, %v892
        %v1149 = vand.u32 2147483647, %v893
        %v1150 = vand.u32 2147483647, %v894
        %v1151 = vand.u32 2147483647, %v895
        %v1152 = vand.u32 2147483647, %v896
        %v1153 = vand.u32 2147483647, %v897
        %v1154 = vand.u32 2147483647, %v898
        %v1155 = vand.u32 2147483647, %v899
        %v1156 = vand.u32 2147483647, %v900
        %v1157 = vand.u32 2147483647, %v901
        %v1158 = vand.u32 2147483647, %v902
        %v1159 = vand.u32 2147483647, %v903
        %v1160 = vand.u32 2147483647, %v904
        %v1161 = vand.u32 2147483647, %v905
        %v1162 = vand.u32 2147483647, %v906
        %v1163 = vand.u32 2147483647, %v907
        %v1164 = vand.u32 2147483647, %v908
        %v1165 = vand.u32 2147483647, %v909
        %v1166 = vand.u32 2147483647, %v910
        %v1167 = vand.u32 2147483647, %v911
        %v1168 = vand.u32 2147483647, %v912
        %v1169 = vand.u32 2147483647, %v913
        %v1170 = vand.u32 2147483647, %v914
        %v1171 = vand.u32 2147483647, %v915
        %v1172 = vand.u32 2147483647, %v916
        %v1173 = vand.u32 2147483647, %v917
        %v1174 = vand.u32 2147483647, %v918
        %v1175 = vand.u32 2147483647, %v919
        %v1176 = vand.u32 2147483647, %v920
        %v1177 = vand.u32 2147483647, %v921
        %v1178 = vand.u32 2147483647, %v922
        %v1179 = vand.u32 2147483647, %v923
        %v1180 = vand.u32 2147483647, %v924
        %v1181 = vand.u32 2147483647, %v925
        %v1182 = vand.u32 2147483647, %v926
        %v1183 = vand.u32 2147483647, %v927
        %v1184 = vand.u32 2147483647, %v928
        %v1185 = vand.u32 2147483647, %v929
        %v1186 = vand.u32 2147483647, %v930
        %v1187 = vand.u32 2147483647, %v931
        %v1188 = vand.u32 2147483647, %v932
        %v1189 = vand.u32 2147483647, %v933
        %v1190 = vand.u32 2147483647, %v934
        %1191 = vst [vmem:[%s162] sm:$0xff] %v935
        %1192 = vst [vmem:[%s162 + $0x8] sm:$0xff] %v936
        %1193 = vst [vmem:[%s162 + $0x10] sm:$0xff] %v937
        %1194 = vst [vmem:[%s162 + $0x18] sm:$0xff] %v938
        %1195 = vst [vmem:[%s162 + $0x20] sm:$0xff] %v939
        %1196 = vst [vmem:[%s162 + $0x28] sm:$0xff] %v940
        %1197 = vst [vmem:[%s162 + $0x30] sm:$0xff] %v941
        %1198 = vst [vmem:[%s162 + $0x38] sm:$0xff] %v942
        %1199 = vst [vmem:[%s162 + $0x40] sm:$0xff] %v943
        %1200 = vst [vmem:[%s162 + $0x48] sm:$0xff] %v944
        %1201 = vst [vmem:[%s162 + $0x50] sm:$0xff] %v945
        %1202 = vst [vmem:[%s162 + $0x58] sm:$0xff] %v946
        %1203 = vst [vmem:[%s162 + $0x60] sm:$0xff] %v947
        %1204 = vst [vmem:[%s162 + $0x68] sm:$0xff] %v948
        %1205 = vst [vmem:[%s162 + $0x70] sm:$0xff] %v949
        %1206 = vst [vmem:[%s162 + $0x78] sm:$0xff] %v950
        %1207 = vst [vmem:[%s162 + $0x80] sm:$0xff] %v951
        %1208 = vst [vmem:[%s162 + $0x88] sm:$0xff] %v952
        %1209 = vst [vmem:[%s162 + $0x90] sm:$0xff] %v953
        %1210 = vst [vmem:[%s162 + $0x98] sm:$0xff] %v954
        %1211 = vst [vmem:[%s162 + $0xa0] sm:$0xff] %v955
        %1212 = vst [vmem:[%s162 + $0xa8] sm:$0xff] %v956
        %1213 = vst [vmem:[%s162 + $0xb0] sm:$0xff] %v957
        %1214 = vst [vmem:[%s162 + $0xb8] sm:$0xff] %v958
        %1215 = vst [vmem:[%s162 + $0xc0] sm:$0xff] %v959
        %1216 = vst [vmem:[%s162 + $0xc8] sm:$0xff] %v960
        %1217 = vst [vmem:[%s162 + $0xd0] sm:$0xff] %v961
        %1218 = vst [vmem:[%s162 + $0xd8] sm:$0xff] %v962
        %1219 = vst [vmem:[%s162 + $0xe0] sm:$0xff] %v963
        %1220 = vst [vmem:[%s162 + $0xe8] sm:$0xff] %v964
        %1221 = vst [vmem:[%s162 + $0xf0] sm:$0xff] %v965
        %1222 = vst [vmem:[%s162 + $0xf8] sm:$0xff] %v966
        %1223 = vst [vmem:[%s162 + $0x100] sm:$0xff] %v967
        %1224 = vst [vmem:[%s162 + $0x108] sm:$0xff] %v968
        %1225 = vst [vmem:[%s162 + $0x110] sm:$0xff] %v969
        %1226 = vst [vmem:[%s162 + $0x118] sm:$0xff] %v970
        %1227 = vst [vmem:[%s162 + $0x120] sm:$0xff] %v971
        %1228 = vst [vmem:[%s162 + $0x128] sm:$0xff] %v972
        %1229 = vst [vmem:[%s162 + $0x130] sm:$0xff] %v973
        %1230 = vst [vmem:[%s162 + $0x138] sm:$0xff] %v974
        %1231 = vst [vmem:[%s162 + $0x140] sm:$0xff] %v975
        %1232 = vst [vmem:[%s162 + $0x148] sm:$0xff] %v976
        %1233 = vst [vmem:[%s162 + $0x150] sm:$0xff] %v977
        %1234 = vst [vmem:[%s162 + $0x158] sm:$0xff] %v978
        %1235 = vst [vmem:[%s162 + $0x160] sm:$0xff] %v979
        %1236 = vst [vmem:[%s162 + $0x168] sm:$0xff] %v980
        %1237 = vst [vmem:[%s162 + $0x170] sm:$0xff] %v981
        %1238 = vst [vmem:[%s162 + $0x178] sm:$0xff] %v982
        %1239 = vst [vmem:[%s162 + $0x180] sm:$0xff] %v983
        %1240 = vst [vmem:[%s162 + $0x188] sm:$0xff] %v984
        %1241 = vst [vmem:[%s162 + $0x190] sm:$0xff] %v985
        %1242 = vst [vmem:[%s162 + $0x198] sm:$0xff] %v986
        %1243 = vst [vmem:[%s162 + $0x1a0] sm:$0xff] %v987
        %1244 = vst [vmem:[%s162 + $0x1a8] sm:$0xff] %v988
        %1245 = vst [vmem:[%s162 + $0x1b0] sm:$0xff] %v989
        %1246 = vst [vmem:[%s162 + $0x1b8] sm:$0xff] %v990
        %1247 = vst [vmem:[%s162 + $0x1c0] sm:$0xff] %v991
        %1248 = vst [vmem:[%s162 + $0x1c8] sm:$0xff] %v992
        %1249 = vst [vmem:[%s162 + $0x1d0] sm:$0xff] %v993
        %1250 = vst [vmem:[%s162 + $0x1d8] sm:$0xff] %v994
        %1251 = vst [vmem:[%s162 + $0x1e0] sm:$0xff] %v995
        %1252 = vst [vmem:[%s162 + $0x1e8] sm:$0xff] %v996
        %1253 = vst [vmem:[%s162 + $0x1f0] sm:$0xff] %v997
        %1254 = vst [vmem:[%s162 + $0x1f8] sm:$0xff] %v998
        %1255 = vst [vmem:[%s162 + $0x200] sm:$0xff] %v999
        %1256 = vst [vmem:[%s162 + $0x208] sm:$0xff] %v1000
        %1257 = vst [vmem:[%s162 + $0x210] sm:$0xff] %v1001
        %1258 = vst [vmem:[%s162 + $0x218] sm:$0xff] %v1002
        %1259 = vst [vmem:[%s162 + $0x220] sm:$0xff] %v1003
        %1260 = vst [vmem:[%s162 + $0x228] sm:$0xff] %v1004
        %1261 = vst [vmem:[%s162 + $0x230] sm:$0xff] %v1005
        %1262 = vst [vmem:[%s162 + $0x238] sm:$0xff] %v1006
        %1263 = vst [vmem:[%s162 + $0x240] sm:$0xff] %v1007
        %1264 = vst [vmem:[%s162 + $0x248] sm:$0xff] %v1008
        %1265 = vst [vmem:[%s162 + $0x250] sm:$0xff] %v1009
        %1266 = vst [vmem:[%s162 + $0x258] sm:$0xff] %v1010
        %1267 = vst [vmem:[%s162 + $0x260] sm:$0xff] %v1011
        %1268 = vst [vmem:[%s162 + $0x268] sm:$0xff] %v1012
        %1269 = vst [vmem:[%s162 + $0x270] sm:$0xff] %v1013
        %1270 = vst [vmem:[%s162 + $0x278] sm:$0xff] %v1014
        %1271 = vst [vmem:[%s162 + $0x280] sm:$0xff] %v1015
        %1272 = vst [vmem:[%s162 + $0x288] sm:$0xff] %v1016
        %1273 = vst [vmem:[%s162 + $0x290] sm:$0xff] %v1017
        %1274 = vst [vmem:[%s162 + $0x298] sm:$0xff] %v1018
        %1275 = vst [vmem:[%s162 + $0x2a0] sm:$0xff] %v1019
        %1276 = vst [vmem:[%s162 + $0x2a8] sm:$0xff] %v1020
        %1277 = vst [vmem:[%s162 + $0x2b0] sm:$0xff] %v1021
        %1278 = vst [vmem:[%s162 + $0x2b8] sm:$0xff] %v1022
        %1279 = vst [vmem:[%s162 + $0x2c0] sm:$0xff] %v1023
        %1280 = vst [vmem:[%s162 + $0x2c8] sm:$0xff] %v1024
        %1281 = vst [vmem:[%s162 + $0x2d0] sm:$0xff] %v1025
        %1282 = vst [vmem:[%s162 + $0x2d8] sm:$0xff] %v1026
        %1283 = vst [vmem:[%s162 + $0x2e0] sm:$0xff] %v1027
        %1284 = vst [vmem:[%s162 + $0x2e8] sm:$0xff] %v1028
        %1285 = vst [vmem:[%s162 + $0x2f0] sm:$0xff] %v1029
        %1286 = vst [vmem:[%s162 + $0x2f8] sm:$0xff] %v1030
        %1287 = vst [vmem:[%s162 + $0x300] sm:$0xff] %v1031
        %1288 = vst [vmem:[%s162 + $0x308] sm:$0xff] %v1032
        %1289 = vst [vmem:[%s162 + $0x310] sm:$0xff] %v1033
        %1290 = vst [vmem:[%s162 + $0x318] sm:$0xff] %v1034
        %1291 = vst [vmem:[%s162 + $0x320] sm:$0xff] %v1035
        %1292 = vst [vmem:[%s162 + $0x328] sm:$0xff] %v1036
        %1293 = vst [vmem:[%s162 + $0x330] sm:$0xff] %v1037
        %1294 = vst [vmem:[%s162 + $0x338] sm:$0xff] %v1038
        %1295 = vst [vmem:[%s162 + $0x340] sm:$0xff] %v1039
        %1296 = vst [vmem:[%s162 + $0x348] sm:$0xff] %v1040
        %1297 = vst [vmem:[%s162 + $0x350] sm:$0xff] %v1041
        %1298 = vst [vmem:[%s162 + $0x358] sm:$0xff] %v1042
        %1299 = vst [vmem:[%s162 + $0x360] sm:$0xff] %v1043
        %1300 = vst [vmem:[%s162 + $0x368] sm:$0xff] %v1044
        %1301 = vst [vmem:[%s162 + $0x370] sm:$0xff] %v1045
        %1302 = vst [vmem:[%s162 + $0x378] sm:$0xff] %v1046
        %1303 = vst [vmem:[%s162 + $0x380] sm:$0xff] %v1047
        %1304 = vst [vmem:[%s162 + $0x388] sm:$0xff] %v1048
        %1305 = vst [vmem:[%s162 + $0x390] sm:$0xff] %v1049
        %1306 = vst [vmem:[%s162 + $0x398] sm:$0xff] %v1050
        %1307 = vst [vmem:[%s162 + $0x3a0] sm:$0xff] %v1051
        %1308 = vst [vmem:[%s162 + $0x3a8] sm:$0xff] %v1052
        %1309 = vst [vmem:[%s162 + $0x3b0] sm:$0xff] %v1053
        %1310 = vst [vmem:[%s162 + $0x3b8] sm:$0xff] %v1054
        %1311 = vst [vmem:[%s162 + $0x3c0] sm:$0xff] %v1055
        %1312 = vst [vmem:[%s162 + $0x3c8] sm:$0xff] %v1056
        %1313 = vst [vmem:[%s162 + $0x3d0] sm:$0xff] %v1057
        %1314 = vst [vmem:[%s162 + $0x3d8] sm:$0xff] %v1058
        %1315 = vst [vmem:[%s162 + $0x3e0] sm:$0xff] %v1059
        %1316 = vst [vmem:[%s162 + $0x3e8] sm:$0xff] %v1060
        %1317 = vst [vmem:[%s162 + $0x3f0] sm:$0xff] %v1061
        %1318 = vst [vmem:[%s162 + $0x3f8] sm:$0xff] %v1062
        %1319 = vst [vmem:[%s162 + $0x400] sm:$0xff] %v1063
        %1320 = vst [vmem:[%s162 + $0x408] sm:$0xff] %v1064
        %1321 = vst [vmem:[%s162 + $0x410] sm:$0xff] %v1065
        %1322 = vst [vmem:[%s162 + $0x418] sm:$0xff] %v1066
        %1323 = vst [vmem:[%s162 + $0x420] sm:$0xff] %v1067
        %1324 = vst [vmem:[%s162 + $0x428] sm:$0xff] %v1068
        %1325 = vst [vmem:[%s162 + $0x430] sm:$0xff] %v1069
        %1326 = vst [vmem:[%s162 + $0x438] sm:$0xff] %v1070
        %1327 = vst [vmem:[%s162 + $0x440] sm:$0xff] %v1071
        %1328 = vst [vmem:[%s162 + $0x448] sm:$0xff] %v1072
        %1329 = vst [vmem:[%s162 + $0x450] sm:$0xff] %v1073
        %1330 = vst [vmem:[%s162 + $0x458] sm:$0xff] %v1074
        %1331 = vst [vmem:[%s162 + $0x460] sm:$0xff] %v1075
        %1332 = vst [vmem:[%s162 + $0x468] sm:$0xff] %v1076
        %1333 = vst [vmem:[%s162 + $0x470] sm:$0xff] %v1077
        %1334 = vst [vmem:[%s162 + $0x478] sm:$0xff] %v1078
        %1335 = vst [vmem:[%s162 + $0x480] sm:$0xff] %v1079
        %1336 = vst [vmem:[%s162 + $0x488] sm:$0xff] %v1080
        %1337 = vst [vmem:[%s162 + $0x490] sm:$0xff] %v1081
        %1338 = vst [vmem:[%s162 + $0x498] sm:$0xff] %v1082
        %1339 = vst [vmem:[%s162 + $0x4a0] sm:$0xff] %v1083
        %1340 = vst [vmem:[%s162 + $0x4a8] sm:$0xff] %v1084
        %1341 = vst [vmem:[%s162 + $0x4b0] sm:$0xff] %v1085
        %1342 = vst [vmem:[%s162 + $0x4b8] sm:$0xff] %v1086
        %1343 = vst [vmem:[%s162 + $0x4c0] sm:$0xff] %v1087
        %1344 = vst [vmem:[%s162 + $0x4c8] sm:$0xff] %v1088
        %1345 = vst [vmem:[%s162 + $0x4d0] sm:$0xff] %v1089
        %1346 = vst [vmem:[%s162 + $0x4d8] sm:$0xff] %v1090
        %1347 = vst [vmem:[%s162 + $0x4e0] sm:$0xff] %v1091
        %1348 = vst [vmem:[%s162 + $0x4e8] sm:$0xff] %v1092
        %1349 = vst [vmem:[%s162 + $0x4f0] sm:$0xff] %v1093
        %1350 = vst [vmem:[%s162 + $0x4f8] sm:$0xff] %v1094
        %1351 = vst [vmem:[%s162 + $0x500] sm:$0xff] %v1095
        %1352 = vst [vmem:[%s162 + $0x508] sm:$0xff] %v1096
        %1353 = vst [vmem:[%s162 + $0x510] sm:$0xff] %v1097
        %1354 = vst [vmem:[%s162 + $0x518] sm:$0xff] %v1098
        %1355 = vst [vmem:[%s162 + $0x520] sm:$0xff] %v1099
        %1356 = vst [vmem:[%s162 + $0x528] sm:$0xff] %v1100
        %1357 = vst [vmem:[%s162 + $0x530] sm:$0xff] %v1101
        %1358 = vst [vmem:[%s162 + $0x538] sm:$0xff] %v1102
        %1359 = vst [vmem:[%s162 + $0x540] sm:$0xff] %v1103
        %1360 = vst [vmem:[%s162 + $0x548] sm:$0xff] %v1104
        %1361 = vst [vmem:[%s162 + $0x550] sm:$0xff] %v1105
        %1362 = vst [vmem:[%s162 + $0x558] sm:$0xff] %v1106
        %1363 = vst [vmem:[%s162 + $0x560] sm:$0xff] %v1107
        %1364 = vst [vmem:[%s162 + $0x568] sm:$0xff] %v1108
        %1365 = vst [vmem:[%s162 + $0x570] sm:$0xff] %v1109
        %1366 = vst [vmem:[%s162 + $0x578] sm:$0xff] %v1110
        %1367 = vst [vmem:[%s162 + $0x580] sm:$0xff] %v1111
        %1368 = vst [vmem:[%s162 + $0x588] sm:$0xff] %v1112
        %1369 = vst [vmem:[%s162 + $0x590] sm:$0xff] %v1113
        %1370 = vst [vmem:[%s162 + $0x598] sm:$0xff] %v1114
        %1371 = vst [vmem:[%s162 + $0x5a0] sm:$0xff] %v1115
        %1372 = vst [vmem:[%s162 + $0x5a8] sm:$0xff] %v1116
        %1373 = vst [vmem:[%s162 + $0x5b0] sm:$0xff] %v1117
        %1374 = vst [vmem:[%s162 + $0x5b8] sm:$0xff] %v1118
        %1375 = vst [vmem:[%s162 + $0x5c0] sm:$0xff] %v1119
        %1376 = vst [vmem:[%s162 + $0x5c8] sm:$0xff] %v1120
        %1377 = vst [vmem:[%s162 + $0x5d0] sm:$0xff] %v1121
        %1378 = vst [vmem:[%s162 + $0x5d8] sm:$0xff] %v1122
        %1379 = vst [vmem:[%s162 + $0x5e0] sm:$0xff] %v1123
        %1380 = vst [vmem:[%s162 + $0x5e8] sm:$0xff] %v1124
        %1381 = vst [vmem:[%s162 + $0x5f0] sm:$0xff] %v1125
        %1382 = vst [vmem:[%s162 + $0x5f8] sm:$0xff] %v1126
        %1383 = vst [vmem:[%s162 + $0x600] sm:$0xff] %v1127
        %1384 = vst [vmem:[%s162 + $0x608] sm:$0xff] %v1128
        %1385 = vst [vmem:[%s162 + $0x610] sm:$0xff] %v1129
        %1386 = vst [vmem:[%s162 + $0x618] sm:$0xff] %v1130
        %1387 = vst [vmem:[%s162 + $0x620] sm:$0xff] %v1131
        %1388 = vst [vmem:[%s162 + $0x628] sm:$0xff] %v1132
        %1389 = vst [vmem:[%s162 + $0x630] sm:$0xff] %v1133
        %1390 = vst [vmem:[%s162 + $0x638] sm:$0xff] %v1134
        %1391 = vst [vmem:[%s162 + $0x640] sm:$0xff] %v1135
        %1392 = vst [vmem:[%s162 + $0x648] sm:$0xff] %v1136
        %1393 = vst [vmem:[%s162 + $0x650] sm:$0xff] %v1137
        %1394 = vst [vmem:[%s162 + $0x658] sm:$0xff] %v1138
        %1395 = vst [vmem:[%s162 + $0x660] sm:$0xff] %v1139
        %1396 = vst [vmem:[%s162 + $0x668] sm:$0xff] %v1140
        %1397 = vst [vmem:[%s162 + $0x670] sm:$0xff] %v1141
        %1398 = vst [vmem:[%s162 + $0x678] sm:$0xff] %v1142
        %1399 = vst [vmem:[%s162 + $0x680] sm:$0xff] %v1143
        %1400 = vst [vmem:[%s162 + $0x688] sm:$0xff] %v1144
        %1401 = vst [vmem:[%s162 + $0x690] sm:$0xff] %v1145
        %1402 = vst [vmem:[%s162 + $0x698] sm:$0xff] %v1146
        %1403 = vst [vmem:[%s162 + $0x6a0] sm:$0xff] %v1147
        %1404 = vst [vmem:[%s162 + $0x6a8] sm:$0xff] %v1148
        %1405 = vst [vmem:[%s162 + $0x6b0] sm:$0xff] %v1149
        %1406 = vst [vmem:[%s162 + $0x6b8] sm:$0xff] %v1150
        %1407 = vst [vmem:[%s162 + $0x6c0] sm:$0xff] %v1151
        %1408 = vst [vmem:[%s162 + $0x6c8] sm:$0xff] %v1152
        %1409 = vst [vmem:[%s162 + $0x6d0] sm:$0xff] %v1153
        %1410 = vst [vmem:[%s162 + $0x6d8] sm:$0xff] %v1154
        %1411 = vst [vmem:[%s162 + $0x6e0] sm:$0xff] %v1155
        %1412 = vst [vmem:[%s162 + $0x6e8] sm:$0xff] %v1156
        %1413 = vst [vmem:[%s162 + $0x6f0] sm:$0xff] %v1157
        %1414 = vst [vmem:[%s162 + $0x6f8] sm:$0xff] %v1158
        %1415 = vst [vmem:[%s162 + $0x700] sm:$0xff] %v1159
        %1416 = vst [vmem:[%s162 + $0x708] sm:$0xff] %v1160
        %1417 = vst [vmem:[%s162 + $0x710] sm:$0xff] %v1161
        %1418 = vst [vmem:[%s162 + $0x718] sm:$0xff] %v1162
        %1419 = vst [vmem:[%s162 + $0x720] sm:$0xff] %v1163
        %1420 = vst [vmem:[%s162 + $0x728] sm:$0xff] %v1164
        %1421 = vst [vmem:[%s162 + $0x730] sm:$0xff] %v1165
        %1422 = vst [vmem:[%s162 + $0x738] sm:$0xff] %v1166
        %1423 = vst [vmem:[%s162 + $0x740] sm:$0xff] %v1167
        %1424 = vst [vmem:[%s162 + $0x748] sm:$0xff] %v1168
        %1425 = vst [vmem:[%s162 + $0x750] sm:$0xff] %v1169
        %1426 = vst [vmem:[%s162 + $0x758] sm:$0xff] %v1170
        %1427 = vst [vmem:[%s162 + $0x760] sm:$0xff] %v1171
        %1428 = vst [vmem:[%s162 + $0x768] sm:$0xff] %v1172
        %1429 = vst [vmem:[%s162 + $0x770] sm:$0xff] %v1173
        %1430 = vst [vmem:[%s162 + $0x778] sm:$0xff] %v1174
        %1431 = vst [vmem:[%s162 + $0x780] sm:$0xff] %v1175
        %1432 = vst [vmem:[%s162 + $0x788] sm:$0xff] %v1176
        %1433 = vst [vmem:[%s162 + $0x790] sm:$0xff] %v1177
        %1434 = vst [vmem:[%s162 + $0x798] sm:$0xff] %v1178
        %1435 = vst [vmem:[%s162 + $0x7a0] sm:$0xff] %v1179
        %1436 = vst [vmem:[%s162 + $0x7a8] sm:$0xff] %v1180
        %1437 = vst [vmem:[%s162 + $0x7b0] sm:$0xff] %v1181
        %1438 = vst [vmem:[%s162 + $0x7b8] sm:$0xff] %v1182
        %1439 = vst [vmem:[%s162 + $0x7c0] sm:$0xff] %v1183
        %1440 = vst [vmem:[%s162 + $0x7c8] sm:$0xff] %v1184
        %1441 = vst [vmem:[%s162 + $0x7d0] sm:$0xff] %v1185
        %1442 = vst [vmem:[%s162 + $0x7d8] sm:$0xff] %v1186
        %1443 = vst [vmem:[%s162 + $0x7e0] sm:$0xff] %v1187
        %1444 = vst [vmem:[%s162 + $0x7e8] sm:$0xff] %v1188
        %1445 = vst [vmem:[%s162 + $0x7f0] sm:$0xff] %v1189
        %1446 = vst [vmem:[%s162 + $0x7f8] sm:$0xff] %v1190
        %s1447 = sand.u32 %s75, 1
        %s1448 = scalar_lea.sflag [#allocation5], %s1447
        %s1449 = sand.u32 %s75, 1
        %s1450 = smul.addr %s1449, 2048
        %s1451 = scalar_lea.vmem [#allocation6], %s1450
        // Predicated region
        $region33: #{tpu_custom_call.1} parent=27 // pred_check
          %p1452 = pneg %p85
        $region34: #{tpu_custom_call.1} parent=27 // pred_check_branch
          %1454 = sbr.rel (%p1452) target = $region36
        $region35: #{tpu_custom_call.1} parent=27 // pred_region
          %s1455 = smul.u32 256, %s20
          %s1457 = ssub.s32 32768, 32768
          %1458 = vsyncadd %s1448, %s1457
          %s1459 = smul.addr %s1455, 128
          %s1460 = scalar_lea.hbm %s2, %s1459
          %s1461 = sshll.u32 %s1451, 4
          %s1462 = int_to_ptr.vmem [resolvable:$true] %s1461
          %1467 = dma.vmem_to_hbm [thread:$0]  %s1462, 32768, %s1460, %s1448, 128, 128, 8
        $region36: #{tpu_custom_call.1} parent=27 // pred_fallthru
          _
      $region28: #{tpu_custom_call.1} parent=5 // pred_fallthru
        _
      %p1468 = scmp.le.s32.totalorder 2, %s15
      // Predicated region
      $region37: #{tpu_custom_call.1} parent=5 // pred_check
        %p1469 = pneg %p1468
      $region38: #{tpu_custom_call.1} parent=5 // pred_check_branch
        %1471 = sbr.rel (%p1469) target = $region40
      $region39: #{tpu_custom_call.1} parent=5 // pred_region
        %s1472 = ssub.s32 %s15, 2
        // Predicated region
        $region41: #{tpu_custom_call.1} parent=39 // pred_check
          %p1473 = pneg %p91
        $region42: #{tpu_custom_call.1} parent=39 // pred_check_branch
          %1475 = sbr.rel (%p1473) target = $region44
        $region43: #{tpu_custom_call.1} parent=39 // pred_region
          %s1476 = sand.u32 %s76, 1
          %s1477 = scalar_lea.sflag [#allocation5], %s1476
          %s1478 = sand.u32 %s76, 1
          %s1479 = smul.addr %s1478, 2048
          %s1480 = scalar_lea.vmem [#allocation6], %s1479
          %1481 = dma.done %s1477, 32768
        $region44: #{tpu_custom_call.1} parent=39 // pred_fallthru
          _
      $region40: #{tpu_custom_call.1} parent=5 // pred_fallthru
        _
    $region6: #{tpu_custom_call.1} parent=1 // loop_footer
      %s19 = sadd.s32 1, %s15
    $region7: #{tpu_custom_call.1} parent=1 // loop_footer_branch
      %14 = sbr.rel target = $region3
    $region8: #{tpu_custom_call.1} parent=1 // loop_exit
      _
    %1482 = vsyncpa [#allocation4], 1
    %s1483 = scalar_lea.sflag [#allocation4], 1
    %1484 = vsyncpa %s1483, 1
    %1485 = vsyncpa [#allocation5], 1
    %s1486 = scalar_lea.sflag [#allocation5], 1
    %1487 = vsyncpa %s1486, 1

</llo_original>
